<compile_context>
chip_gen: v7x
topology: tpu7x:2x2x1
jax: 0.10.0
libtpu: 0.0.40
codegen_flags: <defaults>
</compile_context>

<pallas_src>
import functools

import jax
import jax.numpy as jnp
from jax.experimental import pallas as pl
from jax.experimental.pallas import tpu as pltpu

_VMEM_LIMIT = 48 * 1024 * 1024  # generation-safe (< v7x 64 MiB physical VMEM)


def _round_up(v, m):
    return ((v + m - 1) // m) * m


def _pick_tile(n, candidates, min_tiles=1):
    # Largest MXU/lane-friendly tile that evenly divides n with at least
    # `min_tiles` tiles.  n is always a multiple of 256 here, so 128 works.
    for c in candidates:
        if n % c == 0 and n // c >= min_tiles:
            return c
    return n


# ---------------------------------------------------------------------------
# Kernels
# ---------------------------------------------------------------------------

def _feature_matmul_kernel(x_ref, w_ref, out_ref):
    # s_tile = x_tile @ W : bf16 operands (pre-cast in wrapper), f32 accumulate.
    out_ref[...] = jnp.dot(
        x_ref[...], w_ref[...], preferred_element_type=jnp.float32
    ).astype(out_ref.dtype)


def _aggregate_kernel(adj_ref, s_ref, out_ref, acc_ref, *, apply_relu, tk):
    # out_row_tile = act( sum_k adj[i, k-slab] @ s[k-slab, :] )
    # s_ref is the full (N, Hpad) matrix, VMEM-resident across the grid
    # (constant index_map -> single DMA); the K-slab is sliced here.
    k = pl.program_id(1)

    @pl.when(k == 0)
    def _():
        acc_ref[...] = jnp.zeros_like(acc_ref)

    koff = pl.multiple_of(k * tk, tk)
    a = adj_ref[...].astype(jnp.bfloat16)       # no-op if adj already bf16
    acc_ref[...] += jnp.dot(
        a, s_ref[pl.ds(koff, tk), :], preferred_element_type=jnp.float32
    )

    @pl.when(k == pl.num_programs(1) - 1)
    def _():
        r = acc_ref[...]
        if apply_relu:
            r = jnp.maximum(r, 0.0)
        out_ref[...] = r.astype(out_ref.dtype)


def _decoder_kernel(zi_ref, ztj_ref, out_ref):
    # adj_recon block = z_i @ zT[:, j] : plain NN dot on pre-transposed zT,
    # so no per-tile XLU transpose of the second operand.
    out_ref[...] = jnp.dot(
        zi_ref[...], ztj_ref[...], preferred_element_type=jnp.float32
    ).astype(out_ref.dtype)


# ---------------------------------------------------------------------------
# pallas_call wrappers
# ---------------------------------------------------------------------------

def _feature_matmul(x, w, tm):
    n, f = x.shape
    hpad = w.shape[1]
    return pl.pallas_call(
        _feature_matmul_kernel,
        out_shape=jax.ShapeDtypeStruct((n, hpad), jnp.bfloat16),
        grid=(n // tm,),
        in_specs=[
            pl.BlockSpec((tm, f), lambda i: (i, 0)),
            pl.BlockSpec((f, hpad), lambda i: (0, 0)),     # resident bf16 weight
        ],
        out_specs=pl.BlockSpec((tm, hpad), lambda i: (i, 0)),
        compiler_params=pltpu.CompilerParams(
            dimension_semantics=("parallel",),
            vmem_limit_bytes=_VMEM_LIMIT),
    )(x, w)


def _aggregate(adj, s, tm, tk, *, apply_relu, out_dtype):
    n = adj.shape[0]
    hpad = s.shape[1]
    kernel = functools.partial(_aggregate_kernel, apply_relu=apply_relu, tk=tk)
    return pl.pallas_call(
        kernel,
        out_shape=jax.ShapeDtypeStruct((n, hpad), out_dtype),
        grid_spec=pltpu.PrefetchScalarGridSpec(
            num_scalar_prefetch=0,
            grid=(n // tm, n // tk),
            in_specs=[
                # Dominant HBM stream.  If a profile shows the DMA exposed,
                # sweep pipeline_mode=pl.Buffered(3) here.
                pl.BlockSpec((tm, tk), lambda i, k: (i, k)),
                # s fully VMEM-resident (DMA'd once for the whole grid).
                pl.BlockSpec((n, hpad), lambda i, k: (0, 0)),
            ],
            out_specs=pl.BlockSpec((tm, hpad), lambda i, k: (i, 0)),
            scratch_shapes=[pltpu.VMEM((tm, hpad), jnp.float32)],
        ),
        compiler_params=pltpu.CompilerParams(
            dimension_semantics=("parallel", "arbitrary"),
            vmem_limit_bytes=_VMEM_LIMIT),
    )(adj, s)


def _decode(z, zt, tm, tn):
    n, hpad = z.shape
    # Grid ordered (j outer, i inner): the zT column tile only changes on the
    # outer axis, so each is DMA'd exactly once; the tiny z row tiles are
    # re-read n/tn times total (negligible vs. the N x N output write).
    return pl.pallas_call(
        _decoder_kernel,
        # bf16 output: the decoder is output-write-bound (AI ~64 FLOP/B);
        # halving the N x N store ~halves decoder wall time.  Precision
        # tradeoff for downstream loss, within the 2e-2 tolerance used here.
        out_shape=jax.ShapeDtypeStruct((n, n), jnp.bfloat16),
        grid=(n // tn, n // tm),
        in_specs=[
            pl.BlockSpec((tm, hpad), lambda j, i: (i, 0)),
            pl.BlockSpec((hpad, tn), lambda j, i: (0, j)),
        ],
        out_specs=pl.BlockSpec((tm, tn), lambda j, i: (i, j)),
        compiler_params=pltpu.CompilerParams(
            dimension_semantics=("parallel", "parallel"),
            vmem_limit_bytes=_VMEM_LIMIT),
    )(z, zt)


@jax.jit
def gcn_model_ae_forward(x, adj, w1, w2):
    n, _ = x.shape
    h1_dim = w1.shape[1]
    h2_dim = w2.shape[1]
    h1_pad = _round_up(h1_dim, 128)
    h2_pad = _round_up(h2_dim, 128)
    # Pad node count so every grid has >=2 parallel row tiles (megacore on
    # v7x) and stays pipelined; zero-padded rows/cols are numerically inert.
    n_pad = _round_up(n, 256)

    # Tiny weights: pad hidden dims to 128 lanes (lane-dense stores) and
    # pre-cast to bf16 once (half-size resident copy, no per-step VPU cast).
    w1p = jnp.pad(w1, ((0, 0), (0, h1_pad - h1_dim))).astype(jnp.bfloat16)
    w2p = jnp.pad(w2, ((0, h1_pad - w2.shape[0]), (0, h2_pad - h2_dim))
                  ).astype(jnp.bfloat16)

    xp, adjp = x, adj
    if n_pad != n:
        xp = jnp.pad(xp, ((0, n_pad - n), (0, 0)))
        adjp = jnp.pad(adjp, ((0, n_pad - n), (0, n_pad - n)))
    xp = xp.astype(jnp.bfloat16)
    # adj is streamed in whatever dtype it arrives in and cast to bf16 inside
    # the aggregate kernel (no extra materialized cast pass).  If adj is
    # reused across many calls, pre-cast it to bf16 OUTSIDE this jit.

    tm = _pick_tile(n_pad, (512, 256, 128), min_tiles=2)
    tk = _pick_tile(n_pad, (2048, 1024, 512, 256, 128))
    tn = _pick_tile(n_pad, (2048, 1024, 512, 256, 128))

    # Dropout is a no-op here (dropout=0.0 / eval mode), matching the spec.
    s1 = _feature_matmul(xp, w1p, tm)                              # [n_pad, h1_pad] bf16
    h1 = _aggregate(adjp, s1, tm, tk,
                    apply_relu=True, out_dtype=jnp.bfloat16)       # [n_pad, h1_pad] bf16
    s2 = _feature_matmul(h1, w2p, tm)                              # [n_pad, h2_pad] bf16
    z_pad = _aggregate(adjp, s2, tm, tk,
                       apply_relu=False, out_dtype=jnp.float32)    # [n_pad, h2_pad] f32

    # Decoder: bf16 z and a pre-transposed zT (tiny: n_pad x 128 x 2 B).
    z_bf = z_pad.astype(jnp.bfloat16)
    zt = z_bf.T
    adj_recon = _decode(z_bf, zt, tm, tn)                          # [n_pad, n_pad] bf16

    return adj_recon[:n, :n], z_pad[:n, :h2_dim]


def xavier_uniform(key, shape, dtype=jnp.float32):
    # torch.nn.init.xavier_uniform_ : U(-a, a), a = sqrt(6 / (fan_in + fan_out))
    fan_in, fan_out = shape
    a = (6.0 / (fan_in + fan_out)) ** 0.5
    return jax.random.uniform(key, shape, dtype=dtype, minval=-a, maxval=a)


if __name__ == "__main__":
    # Small shapes: N nodes, input feature dim F, hidden dims H1 / H2.
    N, F_IN, H1, H2 = 128, 64, 32, 16

    key = jax.random.PRNGKey(0)
    k_x, k_adj, k_w1, k_w2 = jax.random.split(key, 4)

    x = jax.random.normal(k_x, (N, F_IN), dtype=jnp.float32)

    # Symmetric, row-normalized dense adjacency (typical GCN preprocessing).
    a_raw = (jax.random.uniform(k_adj, (N, N)) < 0.05).astype(jnp.float32)
    a_sym = jnp.clip(a_raw + a_raw.T, 0.0, 1.0) + jnp.eye(N, dtype=jnp.float32)
    deg = jnp.sum(a_sym, axis=1, keepdims=True)
    adj = a_sym / deg

    w1 = xavier_uniform(k_w1, (F_IN, H1))
    w2 = xavier_uniform(k_w2, (H1, H2))

    # adj is static across GAE forwards -> pre-cast to bf16 once, OUTSIDE the
    # jit, so the streamed adj bytes per forward are halved with no cast pass.
    adj_bf = adj.astype(jnp.bfloat16)

    adj_recon, z = gcn_model_ae_forward(x, adj_bf, w1, w2)
    jax.block_until_ready((adj_recon, z))
    assert adj_recon.shape == (N, N) and z.shape == (N, H2)

    # Pure-JAX f32 reference (same semantics as the PyTorch forward).
    h1_ref = jnp.maximum(adj @ (x @ w1), 0.0)
    z_ref = adj @ (h1_ref @ w2)
    adj_recon_ref = z_ref @ z_ref.T

    # bf16 adj / bf16 operands / bf16 decoder output -> relaxed tolerance.
    assert jnp.allclose(z, z_ref, atol=2e-2, rtol=2e-2), \
        float(jnp.max(jnp.abs(z - z_ref)))
    ar = adj_recon.astype(jnp.float32)
    assert jnp.allclose(ar, adj_recon_ref, atol=2e-2, rtol=2e-2), \
        float(jnp.max(jnp.abs(ar - adj_recon_ref)))

    print("KERNEL_OK")
</pallas_src>

<mosaic_0001>
module attributes {stable_mosaic.version = 11 : i64} {
  func.func @_feature_matmul_kernel(%arg0: i32, %arg1: memref<128x64xbf16, #tpu.memory_space<vmem>>, %arg2: memref<64x128xbf16, #tpu.memory_space<vmem>>, %arg3: memref<128x128xbf16, #tpu.memory_space<vmem>>) attributes {dimension_semantics = [#tpu.dimension_semantics<parallel>], iteration_bounds = array<i64: 2>, scalar_prefetch = 0 : i64, scratch_operands = 0 : i64, tpu.core_type = #tpu.core_type<tc>, window_params = [{transform_indices = @transform_0, window_bounds = array<i64: 128, 64>}, {pipeline_mode = #tpu.pipeline_mode<synchronous>, transform_indices = @transform_1, window_bounds = array<i64: 64, 128>}, {transform_indices = @transform_2, window_bounds = array<i64: 128, 128>}]} {
    %c0 = arith.constant 0 : index
    %c0_0 = arith.constant 0 : index
    %0 = vector.load %arg1[%c0, %c0_0] : memref<128x64xbf16, #tpu.memory_space<vmem>>, vector<128x64xbf16>
    %c0_1 = arith.constant 0 : index
    %c0_2 = arith.constant 0 : index
    %1 = vector.load %arg2[%c0_1, %c0_2] : memref<64x128xbf16, #tpu.memory_space<vmem>>, vector<64x128xbf16>
    %cst = arith.constant dense<0.000000e+00> : vector<128x128xf32>
    %2 = tpu.matmul %0, %1, %cst {dimension_numbers = #tpu.dot_dimension_numbers<[1], [0], [0], [1], [0, 0, 1, 1], [], []>} : vector<128x64xbf16>, vector<64x128xbf16>, vector<128x128xf32> -> vector<128x128xf32>
    %3 = arith.truncf %2 : vector<128x128xf32> to vector<128x128xbf16>
    %c0_3 = arith.constant 0 : index
    %c0_4 = arith.constant 0 : index
    %4 = vector.load %arg3[%c0_3, %c0_4] : memref<128x128xbf16, #tpu.memory_space<vmem>>, vector<128x128xbf16>
    tpu.vector_store %arg3[%c0_3, %c0_4], %3 {strides = array<i32>} : memref<128x128xbf16, #tpu.memory_space<vmem>>, vector<128x128xbf16>,
    return
  }
  func.func @transform_0(%arg0: i32) -> (i32, i32) {
    %c0_i32 = arith.constant 0 : i32
    %c0_i32_0 = arith.constant 0 : i32
    return %arg0, %c0_i32 : i32, i32
  }
  func.func @transform_1(%arg0: i32) -> (i32, i32) {
    %c0_i32 = arith.constant 0 : i32
    %c0_i32_0 = arith.constant 0 : i32
    %c0_i32_1 = arith.constant 0 : i32
    return %c0_i32, %c0_i32_0 : i32, i32
  }
  func.func @transform_2(%arg0: i32) -> (i32, i32) {
    %c0_i32 = arith.constant 0 : i32
    %c0_i32_0 = arith.constant 0 : i32
    return %arg0, %c0_i32 : i32, i32
  }
}

module attributes {stable_mosaic.version = 11 : i64} {
  func.func @_aggregate_kernel(%arg0: i32, %arg1: i32, %arg2: memref<128x256xbf16, #tpu.memory_space<vmem>>, %arg3: memref<256x128xbf16, #tpu.memory_space<vmem>>, %arg4: memref<128x128xbf16, #tpu.memory_space<vmem>>, %arg5: memref<128x128xf32, #tpu.memory_space<vmem>>) attributes {dimension_semantics = [#tpu.dimension_semantics<parallel>, #tpu.dimension_semantics<arbitrary>], iteration_bounds = array<i64: 2, 1>, scalar_prefetch = 0 : i64, scratch_operands = 1 : i64, tpu.core_type = #tpu.core_type<tc>, window_params = [{transform_indices = @transform_0, window_bounds = array<i64: 128, 256>}, {pipeline_mode = #tpu.pipeline_mode<synchronous>, transform_indices = @transform_1, window_bounds = array<i64: 256, 128>}, {transform_indices = @transform_2, window_bounds = array<i64: 128, 128>}]} {
    %c0_i32 = arith.constant 0 : i32
    %0 = arith.cmpi eq, %arg1, %c0_i32 : i32
    %1 = arith.extui %0 : i1 to i32
    %c0_i32_0 = arith.constant 0 : i32
    %2 = arith.cmpi ne, %1, %c0_i32_0 : i32
    scf.if %2 {
      %cst_9 = arith.constant 0.000000e+00 : f32
      %15 = vector.broadcast %cst_9 : f32 to vector<128x128xf32>
      %c0_10 = arith.constant 0 : index
      %c0_11 = arith.constant 0 : index
      %16 = vector.load %arg5[%c0_10, %c0_11] : memref<128x128xf32, #tpu.memory_space<vmem>>, vector<128x128xf32>
      tpu.vector_store %arg5[%c0_10, %c0_11], %15 {strides = array<i32>} : memref<128x128xf32, #tpu.memory_space<vmem>>, vector<128x128xf32>,
    } else {
    }
    %c256_i32 = arith.constant 256 : i32
    %3 = arith.muli %arg1, %c256_i32 : i32
    %4 = tpu.assume_multiple %3, 256 : i32
    %c0 = arith.constant 0 : index
    %c0_1 = arith.constant 0 : index
    %5 = vector.load %arg2[%c0, %c0_1] : memref<128x256xbf16, #tpu.memory_space<vmem>>, vector<128x256xbf16>
    %c0_2 = arith.constant 0 : index
    %c0_3 = arith.constant 0 : index
    %6 = vector.load %arg5[%c0_2, %c0_3] : memref<128x128xf32, #tpu.memory_space<vmem>>, vector<128x128xf32>
    %7 = arith.index_cast %4 : i32 to index
    %c0_4 = arith.constant 0 : index
    %8 = vector.load %arg3[%7, %c0_4] : memref<256x128xbf16, #tpu.memory_space<vmem>>, vector<256x128xbf16>
    %cst = arith.constant dense<0.000000e+00> : vector<128x128xf32>
    %9 = tpu.matmul %5, %8, %cst {dimension_numbers = #tpu.dot_dimension_numbers<[1], [0], [0], [1], [0, 0, 1, 1], [], []>} : vector<128x256xbf16>, vector<256x128xbf16>, vector<128x128xf32> -> vector<128x128xf32>
    %10 = arith.addf %6, %9 : vector<128x128xf32>
    %c0_5 = arith.constant 0 : index
    %c0_6 = arith.constant 0 : index
    %11 = vector.load %arg5[%c0_5, %c0_6] : memref<128x128xf32, #tpu.memory_space<vmem>>, vector<128x128xf32>
    tpu.vector_store %arg5[%c0_5, %c0_6], %10 {strides = array<i32>} : memref<128x128xf32, #tpu.memory_space<vmem>>, vector<128x128xf32>,
    %c0_i32_7 = arith.constant 0 : i32
    %12 = arith.cmpi eq, %arg1, %c0_i32_7 : i32
    %13 = arith.extui %12 : i1 to i32
    %c0_i32_8 = arith.constant 0 : i32
    %14 = arith.cmpi ne, %13, %c0_i32_8 : i32
    scf.if %14 {
      %c0_9 = arith.constant 0 : index
      %c0_10 = arith.constant 0 : index
      %15 = vector.load %arg5[%c0_9, %c0_10] : memref<128x128xf32, #tpu.memory_space<vmem>>, vector<128x128xf32>
      %cst_11 = arith.constant 0.000000e+00 : f32
      %16 = vector.broadcast %cst_11 : f32 to vector<128x128xf32>
      %17 = arith.maximumf %15, %16 : vector<128x128xf32>
      %18 = arith.truncf %17 : vector<128x128xf32> to vector<128x128xbf16>
      %c0_12 = arith.constant 0 : index
      %c0_13 = arith.constant 0 : index
      %19 = vector.load %arg4[%c0_12, %c0_13] : memref<128x128xbf16, #tpu.memory_space<vmem>>, vector<128x128xbf16>
      tpu.vector_store %arg4[%c0_12, %c0_13], %18 {strides = array<i32>} : memref<128x128xbf16, #tpu.memory_space<vmem>>, vector<128x128xbf16>,
    } else {
    }
    return
  }
  func.func @transform_0(%arg0: i32, %arg1: i32) -> (i32, i32) {
    %c0_i32 = arith.constant 0 : i32
    return %arg0, %arg1 : i32, i32
  }
  func.func @transform_1(%arg0: i32, %arg1: i32) -> (i32, i32) {
    %c0_i32 = arith.constant 0 : i32
    %c0_i32_0 = arith.constant 0 : i32
    %c0_i32_1 = arith.constant 0 : i32
    return %c0_i32, %c0_i32_0 : i32, i32
  }
  func.func @transform_2(%arg0: i32, %arg1: i32) -> (i32, i32) {
    %c0_i32 = arith.constant 0 : i32
    %c0_i32_0 = arith.constant 0 : i32
    return %arg0, %c0_i32 : i32, i32
  }
}

module attributes {stable_mosaic.version = 11 : i64} {
  func.func @_feature_matmul_kernel(%arg0: i32, %arg1: memref<128x128xbf16, #tpu.memory_space<vmem>>, %arg2: memref<128x128xbf16, #tpu.memory_space<vmem>>, %arg3: memref<128x128xbf16, #tpu.memory_space<vmem>>) attributes {dimension_semantics = [#tpu.dimension_semantics<parallel>], iteration_bounds = array<i64: 2>, scalar_prefetch = 0 : i64, scratch_operands = 0 : i64, tpu.core_type = #tpu.core_type<tc>, window_params = [{transform_indices = @transform_0, window_bounds = array<i64: 128, 128>}, {pipeline_mode = #tpu.pipeline_mode<synchronous>, transform_indices = @transform_1, window_bounds = array<i64: 128, 128>}, {transform_indices = @transform_2, window_bounds = array<i64: 128, 128>}]} {
    %c0 = arith.constant 0 : index
    %c0_0 = arith.constant 0 : index
    %0 = vector.load %arg1[%c0, %c0_0] : memref<128x128xbf16, #tpu.memory_space<vmem>>, vector<128x128xbf16>
    %c0_1 = arith.constant 0 : index
    %c0_2 = arith.constant 0 : index
    %1 = vector.load %arg2[%c0_1, %c0_2] : memref<128x128xbf16, #tpu.memory_space<vmem>>, vector<128x128xbf16>
    %cst = arith.constant dense<0.000000e+00> : vector<128x128xf32>
    %2 = tpu.matmul %0, %1, %cst {dimension_numbers = #tpu.dot_dimension_numbers<[1], [0], [0], [1], [0, 0, 1, 1], [], []>} : vector<128x128xbf16>, vector<128x128xbf16>, vector<128x128xf32> -> vector<128x128xf32>
    %3 = arith.truncf %2 : vector<128x128xf32> to vector<128x128xbf16>
    %c0_3 = arith.constant 0 : index
    %c0_4 = arith.constant 0 : index
    %4 = vector.load %arg3[%c0_3, %c0_4] : memref<128x128xbf16, #tpu.memory_space<vmem>>, vector<128x128xbf16>
    tpu.vector_store %arg3[%c0_3, %c0_4], %3 {strides = array<i32>} : memref<128x128xbf16, #tpu.memory_space<vmem>>, vector<128x128xbf16>,
    return
  }
  func.func @transform_0(%arg0: i32) -> (i32, i32) {
    %c0_i32 = arith.constant 0 : i32
    %c0_i32_0 = arith.constant 0 : i32
    return %arg0, %c0_i32 : i32, i32
  }
  func.func @transform_1(%arg0: i32) -> (i32, i32) {
    %c0_i32 = arith.constant 0 : i32
    %c0_i32_0 = arith.constant 0 : i32
    %c0_i32_1 = arith.constant 0 : i32
    return %c0_i32, %c0_i32_0 : i32, i32
  }
  func.func @transform_2(%arg0: i32) -> (i32, i32) {
    %c0_i32 = arith.constant 0 : i32
    %c0_i32_0 = arith.constant 0 : i32
    return %arg0, %c0_i32 : i32, i32
  }
}

module attributes {stable_mosaic.version = 11 : i64} {
  func.func @_aggregate_kernel(%arg0: i32, %arg1: i32, %arg2: memref<128x256xbf16, #tpu.memory_space<vmem>>, %arg3: memref<256x128xbf16, #tpu.memory_space<vmem>>, %arg4: memref<128x128xf32, #tpu.memory_space<vmem>>, %arg5: memref<128x128xf32, #tpu.memory_space<vmem>>) attributes {dimension_semantics = [#tpu.dimension_semantics<parallel>, #tpu.dimension_semantics<arbitrary>], iteration_bounds = array<i64: 2, 1>, scalar_prefetch = 0 : i64, scratch_operands = 1 : i64, tpu.core_type = #tpu.core_type<tc>, window_params = [{transform_indices = @transform_0, window_bounds = array<i64: 128, 256>}, {pipeline_mode = #tpu.pipeline_mode<synchronous>, transform_indices = @transform_1, window_bounds = array<i64: 256, 128>}, {transform_indices = @transform_2, window_bounds = array<i64: 128, 128>}]} {
    %c0_i32 = arith.constant 0 : i32
    %0 = arith.cmpi eq, %arg1, %c0_i32 : i32
    %1 = arith.extui %0 : i1 to i32
    %c0_i32_0 = arith.constant 0 : i32
    %2 = arith.cmpi ne, %1, %c0_i32_0 : i32
    scf.if %2 {
      %cst_9 = arith.constant 0.000000e+00 : f32
      %15 = vector.broadcast %cst_9 : f32 to vector<128x128xf32>
      %c0_10 = arith.constant 0 : index
      %c0_11 = arith.constant 0 : index
      %16 = vector.load %arg5[%c0_10, %c0_11] : memref<128x128xf32, #tpu.memory_space<vmem>>, vector<128x128xf32>
      tpu.vector_store %arg5[%c0_10, %c0_11], %15 {strides = array<i32>} : memref<128x128xf32, #tpu.memory_space<vmem>>, vector<128x128xf32>,
    } else {
    }
    %c256_i32 = arith.constant 256 : i32
    %3 = arith.muli %arg1, %c256_i32 : i32
    %4 = tpu.assume_multiple %3, 256 : i32
    %c0 = arith.constant 0 : index
    %c0_1 = arith.constant 0 : index
    %5 = vector.load %arg2[%c0, %c0_1] : memref<128x256xbf16, #tpu.memory_space<vmem>>, vector<128x256xbf16>
    %c0_2 = arith.constant 0 : index
    %c0_3 = arith.constant 0 : index
    %6 = vector.load %arg5[%c0_2, %c0_3] : memref<128x128xf32, #tpu.memory_space<vmem>>, vector<128x128xf32>
    %7 = arith.index_cast %4 : i32 to index
    %c0_4 = arith.constant 0 : index
    %8 = vector.load %arg3[%7, %c0_4] : memref<256x128xbf16, #tpu.memory_space<vmem>>, vector<256x128xbf16>
    %cst = arith.constant dense<0.000000e+00> : vector<128x128xf32>
    %9 = tpu.matmul %5, %8, %cst {dimension_numbers = #tpu.dot_dimension_numbers<[1], [0], [0], [1], [0, 0, 1, 1], [], []>} : vector<128x256xbf16>, vector<256x128xbf16>, vector<128x128xf32> -> vector<128x128xf32>
    %10 = arith.addf %6, %9 : vector<128x128xf32>
    %c0_5 = arith.constant 0 : index
    %c0_6 = arith.constant 0 : index
    %11 = vector.load %arg5[%c0_5, %c0_6] : memref<128x128xf32, #tpu.memory_space<vmem>>, vector<128x128xf32>
    tpu.vector_store %arg5[%c0_5, %c0_6], %10 {strides = array<i32>} : memref<128x128xf32, #tpu.memory_space<vmem>>, vector<128x128xf32>,
    %c0_i32_7 = arith.constant 0 : i32
    %12 = arith.cmpi eq, %arg1, %c0_i32_7 : i32
    %13 = arith.extui %12 : i1 to i32
    %c0_i32_8 = arith.constant 0 : i32
    %14 = arith.cmpi ne, %13, %c0_i32_8 : i32
    scf.if %14 {
      %c0_9 = arith.constant 0 : index
      %c0_10 = arith.constant 0 : index
      %15 = vector.load %arg5[%c0_9, %c0_10] : memref<128x128xf32, #tpu.memory_space<vmem>>, vector<128x128xf32>
      %c0_11 = arith.constant 0 : index
      %c0_12 = arith.constant 0 : index
      %16 = vector.load %arg4[%c0_11, %c0_12] : memref<128x128xf32, #tpu.memory_space<vmem>>, vector<128x128xf32>
      tpu.vector_store %arg4[%c0_11, %c0_12], %15 {strides = array<i32>} : memref<128x128xf32, #tpu.memory_space<vmem>>, vector<128x128xf32>,
    } else {
    }
    return
  }
  func.func @transform_0(%arg0: i32, %arg1: i32) -> (i32, i32) {
    %c0_i32 = arith.constant 0 : i32
    return %arg0, %arg1 : i32, i32
  }
  func.func @transform_1(%arg0: i32, %arg1: i32) -> (i32, i32) {
    %c0_i32 = arith.constant 0 : i32
    %c0_i32_0 = arith.constant 0 : i32
    %c0_i32_1 = arith.constant 0 : i32
    return %c0_i32, %c0_i32_0 : i32, i32
  }
  func.func @transform_2(%arg0: i32, %arg1: i32) -> (i32, i32) {
    %c0_i32 = arith.constant 0 : i32
    %c0_i32_0 = arith.constant 0 : i32
    return %arg0, %c0_i32 : i32, i32
  }
}

module attributes {stable_mosaic.version = 11 : i64} {
  func.func @_decoder_kernel(%arg0: i32, %arg1: i32, %arg2: memref<128x128xbf16, #tpu.memory_space<vmem>>, %arg3: memref<128x256xbf16, #tpu.memory_space<vmem>>, %arg4: memref<128x256xbf16, #tpu.memory_space<vmem>>) attributes {dimension_semantics = [#tpu.dimension_semantics<parallel>, #tpu.dimension_semantics<parallel>], iteration_bounds = array<i64: 1, 2>, scalar_prefetch = 0 : i64, scratch_operands = 0 : i64, tpu.core_type = #tpu.core_type<tc>, window_params = [{transform_indices = @transform_0, window_bounds = array<i64: 128, 128>}, {transform_indices = @transform_1, window_bounds = array<i64: 128, 256>}, {transform_indices = @transform_2, window_bounds = array<i64: 128, 256>}]} {
    %c0 = arith.constant 0 : index
    %c0_0 = arith.constant 0 : index
    %0 = vector.load %arg2[%c0, %c0_0] : memref<128x128xbf16, #tpu.memory_space<vmem>>, vector<128x128xbf16>
    %c0_1 = arith.constant 0 : index
    %c0_2 = arith.constant 0 : index
    %1 = vector.load %arg3[%c0_1, %c0_2] : memref<128x256xbf16, #tpu.memory_space<vmem>>, vector<128x256xbf16>
    %cst = arith.constant dense<0.000000e+00> : vector<128x256xf32>
    %2 = tpu.matmul %0, %1, %cst {dimension_numbers = #tpu.dot_dimension_numbers<[1], [0], [0], [1], [0, 0, 1, 1], [], []>} : vector<128x128xbf16>, vector<128x256xbf16>, vector<128x256xf32> -> vector<128x256xf32>
    %3 = arith.truncf %2 : vector<128x256xf32> to vector<128x256xbf16>
    %c0_3 = arith.constant 0 : index
    %c0_4 = arith.constant 0 : index
    %4 = vector.load %arg4[%c0_3, %c0_4] : memref<128x256xbf16, #tpu.memory_space<vmem>>, vector<128x256xbf16>
    tpu.vector_store %arg4[%c0_3, %c0_4], %3 {strides = array<i32>} : memref<128x256xbf16, #tpu.memory_space<vmem>>, vector<128x256xbf16>,
    return
  }
  func.func @transform_0(%arg0: i32, %arg1: i32) -> (i32, i32) {
    %c0_i32 = arith.constant 0 : i32
    %c0_i32_0 = arith.constant 0 : i32
    return %arg1, %c0_i32 : i32, i32
  }
  func.func @transform_1(%arg0: i32, %arg1: i32) -> (i32, i32) {
    %c0_i32 = arith.constant 0 : i32
    %c0_i32_0 = arith.constant 0 : i32
    return %c0_i32, %arg0 : i32, i32
  }
  func.func @transform_2(%arg0: i32, %arg1: i32) -> (i32, i32) {
    %c0_i32 = arith.constant 0 : i32
    return %arg1, %arg0 : i32, i32
  }
}

</mosaic_0001>

<llo_original>
// kernel: gcn_model_ae_forward.7
$region0: #{gcn_model_ae_forward.7}
  #allocation0 [shape = 'u32[]', space=smem, size = 0x4, offset = 0x4, fixed_abs, tag = 'smem constant byte address 0x4 - core index']
  #allocation1 [shape = 'u32[144,128]{1,0:T(1,128)}', space=vmem, size = 0x12000, scoped, tag = 'internal scratch']
  %s0 = inlined_call_operand.vmem [shape: bf16[256,128], index: 0, kind: input, shape index: {}]
  %s1 = inlined_call_operand.vmem [shape: bf16[128,128], index: 1, kind: input, shape index: {}]
  %s2 = inlined_call_operand.vmem [shape: bf16[256,128], index: 2, kind: output, shape index: {}]
  %s3 = sld [smem:[#allocation0]]
  $region41: #{gcn_model_ae_forward.7} parent=0
    _
  %s5 = ssub.s32 1, %s3
  %s6 = scalar_select 0, %s5, %s3
  loop: start=0, step=1, limit=4
  $region2: #{gcn_model_ae_forward.7} parent=0 // loop_pre_header
    _
  $region3: #{gcn_model_ae_forward.7} parent=0 // loop_header
    %s8 = sphi 0, %s12
    %p9 = scmp.ge.s32.totalorder %s8, 4
    %s18 = sphi 0, %s20
    %s21 = sphi 0, %s18
    %s22 = sphi 0, %s21
    %s38 = sphi 0, %s22
    %s42 = sphi 0, %s42
    %s44 = sphi 0, %s42
    %s45 = sphi 0, %s44
    %s59 = sphi 0, %s45
    %s65 = sphi 0, %s67
    %s68 = sphi 0, %s65
    %s69 = sphi 0, %s68
    %s85 = sphi 0, %s69
  $region4: #{gcn_model_ae_forward.7} parent=0 // loop_header_branch
    %11 = sbr.rel (%p9) target = $region8
  $region5: #{gcn_model_ae_forward.7} parent=0 // loop_body
    %s13 = ssub.s32 %s8, 1
    %s14 = ssub.s32 %s8, 2
    %s15 = sadd.s32 %s8, 1
    %s16 = ssub.s32 %s8, %s15
    %p17 = scmp.eq.s32.totalorder %s16, 0
    %s19 = sadd.s32 %s18, 1
    %s20 = scalar_select %p17, %s18, %s19
    %p23 = pneg %p17
    %p24 = scmp.eq.s32.totalorder %s8, 1
    %p25 = por %p23, %p24
    %p26 = scmp.ne.s32.totalorder %s18, %s21
    %p27 = scmp.eq.s32.totalorder %s8, 0
    %p28 = por %p26, %p27
    %p29 = scmp.ne.s32.totalorder %s18, %s21
    %p30 = scmp.eq.s32.totalorder %s13, 1
    %p31 = por %p29, %p30
    %p32 = scmp.ne.s32.totalorder %s21, %s22
    %p33 = scmp.eq.s32.totalorder %s13, 0
    %p34 = por %p32, %p33
    %p35 = scmp.ne.s32.totalorder %s21, %s22
    %p36 = scmp.eq.s32.totalorder %s14, 1
    %p37 = por %p35, %p36
    %p39 = scmp.ne.s32.totalorder %s22, %s38
    %p40 = scmp.eq.s32.totalorder %s14, 0
    %p41 = por %p39, %p40
    %s43 = sadd.s32 %s42, 1
    %p46 = scmp.eq.s32.totalorder %s8, 1
    %p47 = scmp.ne.s32.totalorder %s42, %s44
    %p48 = scmp.eq.s32.totalorder %s8, 0
    %p49 = por %p47, %p48
    %p50 = scmp.ne.s32.totalorder %s42, %s44
    %p51 = scmp.eq.s32.totalorder %s13, 1
    %p52 = por %p50, %p51
    %p53 = scmp.ne.s32.totalorder %s44, %s45
    %p54 = scmp.eq.s32.totalorder %s13, 0
    %p55 = por %p53, %p54
    %p56 = scmp.ne.s32.totalorder %s44, %s45
    %p57 = scmp.eq.s32.totalorder %s14, 1
    %p58 = por %p56, %p57
    %p60 = scmp.ne.s32.totalorder %s45, %s59
    %p61 = scmp.eq.s32.totalorder %s14, 0
    %p62 = por %p60, %p61
    %s63 = ssub.s32 %s8, %s15
    %p64 = scmp.eq.s32.totalorder %s63, 0
    %s66 = sadd.s32 %s65, 1
    %s67 = scalar_select %p64, %s65, %s66
    %p70 = pneg %p64
    %p71 = scmp.eq.s32.totalorder %s8, 1
    %p72 = por %p70, %p71
    %p73 = scmp.ne.s32.totalorder %s65, %s68
    %p74 = scmp.eq.s32.totalorder %s8, 0
    %p75 = por %p73, %p74
    %p76 = scmp.ne.s32.totalorder %s65, %s68
    %p77 = scmp.eq.s32.totalorder %s13, 1
    %p78 = por %p76, %p77
    %p79 = scmp.ne.s32.totalorder %s68, %s69
    %p80 = scmp.eq.s32.totalorder %s13, 0
    %p81 = por %p79, %p80
    %p82 = scmp.ne.s32.totalorder %s68, %s69
    %p83 = scmp.eq.s32.totalorder %s14, 1
    %p84 = por %p82, %p83
    %p86 = scmp.ne.s32.totalorder %s69, %s85
    %p87 = scmp.eq.s32.totalorder %s14, 0
    %p88 = por %p86, %p87
    %p89 = scmp.le.s32.totalorder 1, %s8
    %p90 = scmp.lt.s32.totalorder %s8, 3
    %p91 = pnand %p89, %p90
    %p92 = pneg %p91
    // Predicated region
    $region9: #{gcn_model_ae_forward.7} parent=5 // pred_check
      _
    $region10: #{gcn_model_ae_forward.7} parent=5 // pred_check_branch
      %94 = sbr.rel (%p91) target = $region12
    $region11: #{gcn_model_ae_forward.7} parent=5 // pred_region
      %s95 = ssub.s32 %s8, 1
      // Predicated region
      $region13: #{gcn_model_ae_forward.7} parent=11 // pred_check
        %p96 = pneg %p55
      $region14: #{gcn_model_ae_forward.7} parent=11 // pred_check_branch
        %98 = sbr.rel (%p96) target = $region16
      $region15: #{gcn_model_ae_forward.7} parent=11 // pred_region
        _
      $region16: #{gcn_model_ae_forward.7} parent=11 // pred_fallthru
        _
    $region12: #{gcn_model_ae_forward.7} parent=5 // pred_fallthru
      _
    %p99 = scmp.lt.s32.totalorder %s8, 2
    // Predicated region
    $region17: #{gcn_model_ae_forward.7} parent=5 // pred_check
      %p100 = pneg %p99
    $region18: #{gcn_model_ae_forward.7} parent=5 // pred_check_branch
      %102 = sbr.rel (%p100) target = $region20
    $region19: #{gcn_model_ae_forward.7} parent=5 // pred_region
      // Predicated region
      $region21: #{gcn_model_ae_forward.7} parent=19 // pred_check
        %p103 = pneg %p28
      $region22: #{gcn_model_ae_forward.7} parent=19 // pred_check_branch
        %105 = sbr.rel (%p103) target = $region24
      $region23: #{gcn_model_ae_forward.7} parent=19 // pred_region
        %s106 = smul.u32 16, %s8
        %p107 = scmp.lt.s32.totalorder %s106, 31
        %s108 = scalar_select %p107, %s106, 31
        %s109 = smul.addr %s108, 4
        %s110 = scalar_lea.vmem %s0, %s109
        %s111 = smul.u32 16, %s8
      $region24: #{gcn_model_ae_forward.7} parent=19 // pred_fallthru
        _
    $region20: #{gcn_model_ae_forward.7} parent=5 // pred_fallthru
      _
    %p112 = scmp.le.s32.totalorder 1, %s8
    %p113 = scmp.lt.s32.totalorder %s8, 3
    %p114 = pnand %p112, %p113
    %p115 = pneg %p114
    // Predicated region
    $region25: #{gcn_model_ae_forward.7} parent=5 // pred_check
      _
    $region26: #{gcn_model_ae_forward.7} parent=5 // pred_check_branch
      %117 = sbr.rel (%p114) target = $region28
    $region27: #{gcn_model_ae_forward.7} parent=5 // pred_region
      %s118 = ssub.s32 %s8, 1
      %s119 = smul.u32 16, %s13
      %p120 = scmp.lt.s32.totalorder %s119, 31
      %s121 = scalar_select %p120, %s119, 31
      %s122 = smul.addr %s121, 4
      %s123 = scalar_lea.vmem %s0, %s122
      %p124 = pneg %p34
      %p125 = pneg %p31
      %p126 = pneg %p55
      %p127 = pneg %p52
      %p128 = pneg %p81
      %p129 = pneg %p78
      %s130 = smul.u32 16, %s13
      %p131 = scmp.lt.s32.totalorder %s130, 31
      %s132 = scalar_select %p131, %s130, 31
      %s133 = smul.addr %s132, 4
      %s134 = scalar_lea.vmem %s2, %s133
      %s135 = smul.u32 16, %s13
      %p136 = scmp.lt.s32.totalorder %s135, 31
      %s137 = scalar_select %p136, %s135, 31
      %s138 = smul.addr %s137, 4
      %s139 = scalar_lea.vmem %s0, %s138
      %s140 = smul.u32 16, %s13
      %s141 = smul.u32 16, %s13
      %p142 = scmp.lt.s32.totalorder %s141, 31
      %s143 = scalar_select %p142, %s141, 31
      %s144 = smul.addr %s143, 4
      %s145 = scalar_lea.vmem %s2, %s144
      %s146 = smul.u32 16, %s13
      %v148 = vld [vmem:[%s139] sm:$0xf]
      %v149 = vld [vmem:[%s139 + $0x4] sm:$0xf]
      %v150 = vld [vmem:[%s139 + $0x8] sm:$0xf]
      %v151 = vld [vmem:[%s139 + $0xc] sm:$0xf]
      %v152 = vld [vmem:[%s139 + $0x10] sm:$0xf]
      %v153 = vld [vmem:[%s139 + $0x14] sm:$0xf]
      %v154 = vld [vmem:[%s139 + $0x18] sm:$0xf]
      %v155 = vld [vmem:[%s139 + $0x1c] sm:$0xf]
      %v156 = vld [vmem:[%s139 + $0x20] sm:$0xf]
      %v157 = vld [vmem:[%s139 + $0x24] sm:$0xf]
      %v158 = vld [vmem:[%s139 + $0x28] sm:$0xf]
      %v159 = vld [vmem:[%s139 + $0x2c] sm:$0xf]
      %v160 = vld [vmem:[%s139 + $0x30] sm:$0xf]
      %v161 = vld [vmem:[%s139 + $0x34] sm:$0xf]
      %v162 = vld [vmem:[%s139 + $0x38] sm:$0xf]
      %v163 = vld [vmem:[%s139 + $0x3c] sm:$0xf]
      %v164 = vld [vmem:[%s1] sm:$0xf]
      %v165 = vld [vmem:[%s1 + $0x4] sm:$0xf]
      %v166 = vld [vmem:[%s1 + $0x8] sm:$0xf]
      %v167 = vld [vmem:[%s1 + $0xc] sm:$0xf]
      %v168 = vld [vmem:[%s1 + $0x10] sm:$0xf]
      %v169 = vld [vmem:[%s1 + $0x14] sm:$0xf]
      %v170 = vld [vmem:[%s1 + $0x18] sm:$0xf]
      %v171 = vld [vmem:[%s1 + $0x1c] sm:$0xf]
      %v172 = vld [vmem:[%s1 + $0x20] sm:$0xf]
      %v173 = vld [vmem:[%s1 + $0x24] sm:$0xf]
      %v174 = vld [vmem:[%s1 + $0x28] sm:$0xf]
      %v175 = vld [vmem:[%s1 + $0x2c] sm:$0xf]
      %v176 = vld [vmem:[%s1 + $0x30] sm:$0xf]
      %v177 = vld [vmem:[%s1 + $0x34] sm:$0xf]
      %v178 = vld [vmem:[%s1 + $0x38] sm:$0xf]
      %v179 = vld [vmem:[%s1 + $0x3c] sm:$0xf]
      %v196 = vunpack.c.l.b16 %v148
      %v197 = vunpack.c.l.b16 %v149
      %v198 = vunpack.c.l.b16 %v150
      %v199 = vunpack.c.l.b16 %v151
      %v200 = vunpack.c.l.b16 %v152
      %v201 = vunpack.c.l.b16 %v153
      %v202 = vunpack.c.l.b16 %v154
      %v203 = vunpack.c.l.b16 %v155
      %v204 = vunpack.c.l.b16 %v156
      %v205 = vunpack.c.l.b16 %v157
      %v206 = vunpack.c.l.b16 %v158
      %v207 = vunpack.c.l.b16 %v159
      %v208 = vunpack.c.l.b16 %v160
      %v209 = vunpack.c.l.b16 %v161
      %v210 = vunpack.c.l.b16 %v162
      %v211 = vunpack.c.l.b16 %v163
      %v212 = vpack.c.b16 %v197, %v196
      %v213 = vpack.c.b16 %v199, %v198
      %v214 = vpack.c.b16 %v201, %v200
      %v215 = vpack.c.b16 %v203, %v202
      %v216 = vpack.c.b16 %v205, %v204
      %v217 = vpack.c.b16 %v207, %v206
      %v218 = vpack.c.b16 %v209, %v208
      %v219 = vpack.c.b16 %v211, %v210
      %v244 = vunpack.c.l.b16 %v164
      %v245 = vunpack.c.l.b16 %v165
      %v246 = vunpack.c.l.b16 %v166
      %v247 = vunpack.c.l.b16 %v167
      %v248 = vunpack.c.l.b16 %v168
      %v249 = vunpack.c.l.b16 %v169
      %v250 = vunpack.c.l.b16 %v170
      %v251 = vunpack.c.l.b16 %v171
      %v252 = vunpack.c.l.b16 %v172
      %v253 = vunpack.c.l.b16 %v173
      %v254 = vunpack.c.l.b16 %v174
      %v255 = vunpack.c.l.b16 %v175
      %v256 = vunpack.c.l.b16 %v176
      %v257 = vunpack.c.l.b16 %v177
      %v258 = vunpack.c.l.b16 %v178
      %v259 = vunpack.c.l.b16 %v179
      %v260 = vpack.c.b16 %v245, %v244
      %v261 = vpack.c.b16 %v247, %v246
      %v262 = vpack.c.b16 %v249, %v248
      %v263 = vpack.c.b16 %v251, %v250
      %v264 = vpack.c.b16 %v253, %v252
      %v265 = vpack.c.b16 %v255, %v254
      %v266 = vpack.c.b16 %v257, %v256
      %v267 = vpack.c.b16 %v259, %v258
      %276 = vmatprep.subr.bf16.mxu0 0
      %277 = vmatpush1.bf16.msra.mxu0 %v260
      %278 = vmatprep.subr.bf16.mxu0 0
      %279 = vmatpush1.bf16.msra.mxu0 %v261
      %280 = vmatprep.subr.bf16.mxu0 0
      %281 = vmatpush1.bf16.msra.mxu0 %v262
      %282 = vmatprep.subr.bf16.mxu0 0
      %283 = vmatpush1.bf16.msra.mxu0 %v263
      %284 = vmatprep.subr.bf16.mxu0 0
      %285 = vmatpush1.bf16.msra.mxu0 %v264
      %286 = vmatprep.subr.bf16.mxu0 0
      %287 = vmatpush1.bf16.msra.mxu0 %v265
      %288 = vmatprep.subr.bf16.mxu0 0
      %289 = vmatpush1.bf16.msra.mxu0 %v266
      %290 = vmatprep.subr.bf16.mxu0 0
      %291 = vmatpush1.bf16.msra.mxu0 %v267
      %292 = vmatprep.subr.bf16.mxu0 0
      %293 = vmatpush1.bf16.msra.mxu0 0
      %294 = vmatprep.subr.bf16.mxu0 0
      %295 = vmatpush1.bf16.msra.mxu0 0
      %296 = vmatprep.subr.bf16.mxu0 0
      %297 = vmatpush1.bf16.msra.mxu0 0
      %298 = vmatprep.subr.bf16.mxu0 0
      %299 = vmatpush1.bf16.msra.mxu0 0
      %300 = vmatprep.subr.bf16.mxu0 0
      %301 = vmatpush1.bf16.msra.mxu0 0
      %302 = vmatprep.subr.bf16.mxu0 0
      %303 = vmatpush1.bf16.msra.mxu0 0
      %304 = vmatprep.subr.bf16.mxu0 0
      %305 = vmatpush1.bf16.msra.mxu0 0
      %306 = vmatprep.subr.bf16.mxu0 0
      %307 = vmatpush1.bf16.msra.mxu0 0
      %308 = vmatprep.mubr.bf16.mxu0 0
      %309 = vmatmul.mubr.bf16.gmra.mrb[0].mxu0 %v212
      %v310 = vpop.f32.mrb[0].mxu0
      %v311 = vadd.f32 0.0, %v310
      %v312 = vpop.f32.mrb[0].mxu0
      %v313 = vpop.f32.mrb[0].mxu0
      %v314 = vadd.f32 0.0, %v313
      %v315 = vpop.f32.mrb[0].mxu0
      %316 = vmatprep.mubr.bf16.mxu0 0
      %317 = vmatmul.mubr.bf16.gmra.mrb[0].mxu0 %v213
      %v318 = vpop.f32.mrb[0].mxu0
      %v319 = vadd.f32 0.0, %v318
      %v320 = vpop.f32.mrb[0].mxu0
      %v321 = vpop.f32.mrb[0].mxu0
      %v322 = vadd.f32 0.0, %v321
      %v323 = vpop.f32.mrb[0].mxu0
      %324 = vmatprep.mubr.bf16.mxu0 0
      %325 = vmatmul.mubr.bf16.gmra.mrb[0].mxu0 %v214
      %v326 = vpop.f32.mrb[0].mxu0
      %v327 = vadd.f32 0.0, %v326
      %v328 = vpop.f32.mrb[0].mxu0
      %v329 = vpop.f32.mrb[0].mxu0
      %v330 = vadd.f32 0.0, %v329
      %v331 = vpop.f32.mrb[0].mxu0
      %332 = vmatprep.mubr.bf16.mxu0 0
      %333 = vmatmul.mubr.bf16.gmra.mrb[0].mxu0 %v215
      %v334 = vpop.f32.mrb[0].mxu0
      %v335 = vadd.f32 0.0, %v334
      %v336 = vpop.f32.mrb[0].mxu0
      %v337 = vpop.f32.mrb[0].mxu0
      %v338 = vadd.f32 0.0, %v337
      %v339 = vpop.f32.mrb[0].mxu0
      %340 = vmatprep.mubr.bf16.mxu0 0
      %341 = vmatmul.mubr.bf16.gmra.mrb[0].mxu0 %v216
      %v342 = vpop.f32.mrb[0].mxu0
      %v343 = vadd.f32 0.0, %v342
      %v344 = vpop.f32.mrb[0].mxu0
      %v345 = vpop.f32.mrb[0].mxu0
      %v346 = vadd.f32 0.0, %v345
      %v347 = vpop.f32.mrb[0].mxu0
      %348 = vmatprep.mubr.bf16.mxu0 0
      %349 = vmatmul.mubr.bf16.gmra.mrb[0].mxu0 %v217
      %v350 = vpop.f32.mrb[0].mxu0
      %v351 = vadd.f32 0.0, %v350
      %v352 = vpop.f32.mrb[0].mxu0
      %v353 = vpop.f32.mrb[0].mxu0
      %v354 = vadd.f32 0.0, %v353
      %v355 = vpop.f32.mrb[0].mxu0
      %356 = vmatprep.mubr.bf16.mxu0 0
      %357 = vmatmul.mubr.bf16.gmra.mrb[0].mxu0 %v218
      %v358 = vpop.f32.mrb[0].mxu0
      %v359 = vadd.f32 0.0, %v358
      %v360 = vpop.f32.mrb[0].mxu0
      %v361 = vpop.f32.mrb[0].mxu0
      %v362 = vadd.f32 0.0, %v361
      %v363 = vpop.f32.mrb[0].mxu0
      %364 = vmatprep.mubr.bf16.mxu0 0
      %365 = vmatmul.mubr.bf16.gmra.mrb[0].mxu0 %v219
      %v366 = vpop.f32.mrb[0].mxu0
      %v367 = vadd.f32 0.0, %v366
      %v368 = vpop.f32.mrb[0].mxu0
      %v369 = vpop.f32.mrb[0].mxu0
      %v370 = vadd.f32 0.0, %v369
      %v371 = vpop.f32.mrb[0].mxu0
      %372 = vdwg.mxu0
      %v373 = vpack.c.bf16 %v314, %v311
      %v374 = vpack.c.bf16 %v322, %v319
      %v375 = vpack.c.bf16 %v330, %v327
      %v376 = vpack.c.bf16 %v338, %v335
      %v377 = vpack.c.bf16 %v346, %v343
      %v378 = vpack.c.bf16 %v354, %v351
      %v379 = vpack.c.bf16 %v362, %v359
      %v380 = vpack.c.bf16 %v370, %v367
      %v389 = vunpack.c.l.b16 %v373
      %v390 = vunpack.c.h.b16 %v373
      %v391 = vunpack.c.l.b16 %v374
      %v392 = vunpack.c.h.b16 %v374
      %v393 = vunpack.c.l.b16 %v375
      %v394 = vunpack.c.h.b16 %v375
      %v395 = vunpack.c.l.b16 %v376
      %v396 = vunpack.c.h.b16 %v376
      %v397 = vunpack.c.l.b16 %v377
      %v398 = vunpack.c.h.b16 %v377
      %v399 = vunpack.c.l.b16 %v378
      %v400 = vunpack.c.h.b16 %v378
      %v401 = vunpack.c.l.b16 %v379
      %v402 = vunpack.c.h.b16 %v379
      %v403 = vunpack.c.l.b16 %v380
      %v404 = vunpack.c.h.b16 %v380
      %v405 = vpack.c.b16 %v389, %v389
      %v406 = vpack.c.b16 %v390, %v390
      %v407 = vpack.c.b16 %v391, %v391
      %v408 = vpack.c.b16 %v392, %v392
      %v409 = vpack.c.b16 %v393, %v393
      %v410 = vpack.c.b16 %v394, %v394
      %v411 = vpack.c.b16 %v395, %v395
      %v412 = vpack.c.b16 %v396, %v396
      %v413 = vpack.c.b16 %v397, %v397
      %v414 = vpack.c.b16 %v398, %v398
      %v415 = vpack.c.b16 %v399, %v399
      %v416 = vpack.c.b16 %v400, %v400
      %v417 = vpack.c.b16 %v401, %v401
      %v418 = vpack.c.b16 %v402, %v402
      %v419 = vpack.c.b16 %v403, %v403
      %v420 = vpack.c.b16 %v404, %v404
      %437 = vst [vmem:[%s145] sm:$0xf] %v405
      %438 = vst [vmem:[%s145 + $0x4] sm:$0xf] %v406
      %439 = vst [vmem:[%s145 + $0x8] sm:$0xf] %v407
      %440 = vst [vmem:[%s145 + $0xc] sm:$0xf] %v408
      %441 = vst [vmem:[%s145 + $0x10] sm:$0xf] %v409
      %442 = vst [vmem:[%s145 + $0x14] sm:$0xf] %v410
      %443 = vst [vmem:[%s145 + $0x18] sm:$0xf] %v411
      %444 = vst [vmem:[%s145 + $0x1c] sm:$0xf] %v412
      %445 = vst [vmem:[%s145 + $0x20] sm:$0xf] %v413
      %446 = vst [vmem:[%s145 + $0x24] sm:$0xf] %v414
      %447 = vst [vmem:[%s145 + $0x28] sm:$0xf] %v415
      %448 = vst [vmem:[%s145 + $0x2c] sm:$0xf] %v416
      %449 = vst [vmem:[%s145 + $0x30] sm:$0xf] %v417
      %450 = vst [vmem:[%s145 + $0x34] sm:$0xf] %v418
      %451 = vst [vmem:[%s145 + $0x38] sm:$0xf] %v419
      %452 = vst [vmem:[%s145 + $0x3c] sm:$0xf] %v420
      %s453 = smul.u32 16, %s13
      %p454 = scmp.lt.s32.totalorder %s453, 31
      %s455 = scalar_select %p454, %s453, 31
      %s456 = smul.addr %s455, 4
      %s457 = scalar_lea.vmem %s2, %s456
      // Predicated region
      $region29: #{gcn_model_ae_forward.7} parent=27 // pred_check
        %p458 = pneg %p78
      $region30: #{gcn_model_ae_forward.7} parent=27 // pred_check_branch
        %460 = sbr.rel (%p458) target = $region32
      $region31: #{gcn_model_ae_forward.7} parent=27 // pred_region
        %s461 = smul.u32 16, %s13
      $region32: #{gcn_model_ae_forward.7} parent=27 // pred_fallthru
        _
    $region28: #{gcn_model_ae_forward.7} parent=5 // pred_fallthru
      _
    %p462 = scmp.le.s32.totalorder 2, %s8
    // Predicated region
    $region33: #{gcn_model_ae_forward.7} parent=5 // pred_check
      %p463 = pneg %p462
    $region34: #{gcn_model_ae_forward.7} parent=5 // pred_check_branch
      %465 = sbr.rel (%p463) target = $region36
    $region35: #{gcn_model_ae_forward.7} parent=5 // pred_region
      %s466 = ssub.s32 %s8, 2
      // Predicated region
      $region37: #{gcn_model_ae_forward.7} parent=35 // pred_check
        %p467 = pneg %p84
      $region38: #{gcn_model_ae_forward.7} parent=35 // pred_check_branch
        %469 = sbr.rel (%p467) target = $region40
      $region39: #{gcn_model_ae_forward.7} parent=35 // pred_region
        %s470 = smul.u32 16, %s14
        %p471 = scmp.lt.s32.totalorder %s470, 31
        %s472 = scalar_select %p471, %s470, 31
        %s473 = smul.addr %s472, 4
        %s474 = scalar_lea.vmem %s2, %s473
      $region40: #{gcn_model_ae_forward.7} parent=35 // pred_fallthru
        _
    $region36: #{gcn_model_ae_forward.7} parent=5 // pred_fallthru
      _
  $region6: #{gcn_model_ae_forward.7} parent=0 // loop_footer
    %s12 = sadd.s32 1, %s8
  $region7: #{gcn_model_ae_forward.7} parent=0 // loop_footer_branch
    %7 = sbr.rel target = $region3
  $region8: #{gcn_model_ae_forward.7} parent=0 // loop_exit
    _

// kernel: gcn_model_ae_forward.5
$region0: #{gcn_model_ae_forward.5}
  #allocation0 [shape = 'u32[]', space=smem, size = 0x4, offset = 0x4, fixed_abs, tag = 'smem constant byte address 0x4 - core index']
  #allocation1 [shape = 'u32[144,128]{1,0:T(1,128)}', space=vmem, size = 0x12000, scoped, tag = 'internal scratch']
  %s0 = inlined_call_operand.vmem [shape: bf16[256,64], index: 0, kind: input, shape index: {}]
  %s1 = inlined_call_operand.vmem [shape: bf16[64,128], index: 1, kind: input, shape index: {}]
  %s2 = inlined_call_operand.vmem [shape: bf16[256,128], index: 2, kind: output, shape index: {}]
  %s3 = sld [smem:[#allocation0]]
  $region41: #{gcn_model_ae_forward.5} parent=0
    _
  %s5 = ssub.s32 1, %s3
  %s6 = scalar_select 0, %s5, %s3
  loop: start=0, step=1, limit=4
  $region2: #{gcn_model_ae_forward.5} parent=0 // loop_pre_header
    _
  $region3: #{gcn_model_ae_forward.5} parent=0 // loop_header
    %s8 = sphi 0, %s12
    %p9 = scmp.ge.s32.totalorder %s8, 4
    %s18 = sphi 0, %s20
    %s21 = sphi 0, %s18
    %s22 = sphi 0, %s21
    %s38 = sphi 0, %s22
    %s42 = sphi 0, %s42
    %s44 = sphi 0, %s42
    %s45 = sphi 0, %s44
    %s59 = sphi 0, %s45
    %s65 = sphi 0, %s67
    %s68 = sphi 0, %s65
    %s69 = sphi 0, %s68
    %s85 = sphi 0, %s69
  $region4: #{gcn_model_ae_forward.5} parent=0 // loop_header_branch
    %11 = sbr.rel (%p9) target = $region8
  $region5: #{gcn_model_ae_forward.5} parent=0 // loop_body
    %s13 = ssub.s32 %s8, 1
    %s14 = ssub.s32 %s8, 2
    %s15 = sadd.s32 %s8, 1
    %s16 = ssub.s32 %s8, %s15
    %p17 = scmp.eq.s32.totalorder %s16, 0
    %s19 = sadd.s32 %s18, 1
    %s20 = scalar_select %p17, %s18, %s19
    %p23 = pneg %p17
    %p24 = scmp.eq.s32.totalorder %s8, 1
    %p25 = por %p23, %p24
    %p26 = scmp.ne.s32.totalorder %s18, %s21
    %p27 = scmp.eq.s32.totalorder %s8, 0
    %p28 = por %p26, %p27
    %p29 = scmp.ne.s32.totalorder %s18, %s21
    %p30 = scmp.eq.s32.totalorder %s13, 1
    %p31 = por %p29, %p30
    %p32 = scmp.ne.s32.totalorder %s21, %s22
    %p33 = scmp.eq.s32.totalorder %s13, 0
    %p34 = por %p32, %p33
    %p35 = scmp.ne.s32.totalorder %s21, %s22
    %p36 = scmp.eq.s32.totalorder %s14, 1
    %p37 = por %p35, %p36
    %p39 = scmp.ne.s32.totalorder %s22, %s38
    %p40 = scmp.eq.s32.totalorder %s14, 0
    %p41 = por %p39, %p40
    %s43 = sadd.s32 %s42, 1
    %p46 = scmp.eq.s32.totalorder %s8, 1
    %p47 = scmp.ne.s32.totalorder %s42, %s44
    %p48 = scmp.eq.s32.totalorder %s8, 0
    %p49 = por %p47, %p48
    %p50 = scmp.ne.s32.totalorder %s42, %s44
    %p51 = scmp.eq.s32.totalorder %s13, 1
    %p52 = por %p50, %p51
    %p53 = scmp.ne.s32.totalorder %s44, %s45
    %p54 = scmp.eq.s32.totalorder %s13, 0
    %p55 = por %p53, %p54
    %p56 = scmp.ne.s32.totalorder %s44, %s45
    %p57 = scmp.eq.s32.totalorder %s14, 1
    %p58 = por %p56, %p57
    %p60 = scmp.ne.s32.totalorder %s45, %s59
    %p61 = scmp.eq.s32.totalorder %s14, 0
    %p62 = por %p60, %p61
    %s63 = ssub.s32 %s8, %s15
    %p64 = scmp.eq.s32.totalorder %s63, 0
    %s66 = sadd.s32 %s65, 1
    %s67 = scalar_select %p64, %s65, %s66
    %p70 = pneg %p64
    %p71 = scmp.eq.s32.totalorder %s8, 1
    %p72 = por %p70, %p71
    %p73 = scmp.ne.s32.totalorder %s65, %s68
    %p74 = scmp.eq.s32.totalorder %s8, 0
    %p75 = por %p73, %p74
    %p76 = scmp.ne.s32.totalorder %s65, %s68
    %p77 = scmp.eq.s32.totalorder %s13, 1
    %p78 = por %p76, %p77
    %p79 = scmp.ne.s32.totalorder %s68, %s69
    %p80 = scmp.eq.s32.totalorder %s13, 0
    %p81 = por %p79, %p80
    %p82 = scmp.ne.s32.totalorder %s68, %s69
    %p83 = scmp.eq.s32.totalorder %s14, 1
    %p84 = por %p82, %p83
    %p86 = scmp.ne.s32.totalorder %s69, %s85
    %p87 = scmp.eq.s32.totalorder %s14, 0
    %p88 = por %p86, %p87
    %p89 = scmp.le.s32.totalorder 1, %s8
    %p90 = scmp.lt.s32.totalorder %s8, 3
    %p91 = pnand %p89, %p90
    %p92 = pneg %p91
    // Predicated region
    $region9: #{gcn_model_ae_forward.5} parent=5 // pred_check
      _
    $region10: #{gcn_model_ae_forward.5} parent=5 // pred_check_branch
      %94 = sbr.rel (%p91) target = $region12
    $region11: #{gcn_model_ae_forward.5} parent=5 // pred_region
      %s95 = ssub.s32 %s8, 1
      // Predicated region
      $region13: #{gcn_model_ae_forward.5} parent=11 // pred_check
        %p96 = pneg %p55
      $region14: #{gcn_model_ae_forward.5} parent=11 // pred_check_branch
        %98 = sbr.rel (%p96) target = $region16
      $region15: #{gcn_model_ae_forward.5} parent=11 // pred_region
        _
      $region16: #{gcn_model_ae_forward.5} parent=11 // pred_fallthru
        _
    $region12: #{gcn_model_ae_forward.5} parent=5 // pred_fallthru
      _
    %p99 = scmp.lt.s32.totalorder %s8, 2
    // Predicated region
    $region17: #{gcn_model_ae_forward.5} parent=5 // pred_check
      %p100 = pneg %p99
    $region18: #{gcn_model_ae_forward.5} parent=5 // pred_check_branch
      %102 = sbr.rel (%p100) target = $region20
    $region19: #{gcn_model_ae_forward.5} parent=5 // pred_region
      // Predicated region
      $region21: #{gcn_model_ae_forward.5} parent=19 // pred_check
        %p103 = pneg %p28
      $region22: #{gcn_model_ae_forward.5} parent=19 // pred_check_branch
        %105 = sbr.rel (%p103) target = $region24
      $region23: #{gcn_model_ae_forward.5} parent=19 // pred_region
        %s106 = smul.u32 16, %s8
        %p107 = scmp.lt.s32.totalorder %s106, 31
        %s108 = scalar_select %p107, %s106, 31
        %s109 = smul.addr %s108, 4
        %s110 = scalar_lea.vmem %s0, %s109
        %s111 = smul.u32 16, %s8
      $region24: #{gcn_model_ae_forward.5} parent=19 // pred_fallthru
        _
    $region20: #{gcn_model_ae_forward.5} parent=5 // pred_fallthru
      _
    %p112 = scmp.le.s32.totalorder 1, %s8
    %p113 = scmp.lt.s32.totalorder %s8, 3
    %p114 = pnand %p112, %p113
    %p115 = pneg %p114
    // Predicated region
    $region25: #{gcn_model_ae_forward.5} parent=5 // pred_check
      _
    $region26: #{gcn_model_ae_forward.5} parent=5 // pred_check_branch
      %117 = sbr.rel (%p114) target = $region28
    $region27: #{gcn_model_ae_forward.5} parent=5 // pred_region
      %s118 = ssub.s32 %s8, 1
      %s119 = smul.u32 16, %s13
      %p120 = scmp.lt.s32.totalorder %s119, 31
      %s121 = scalar_select %p120, %s119, 31
      %s122 = smul.addr %s121, 4
      %s123 = scalar_lea.vmem %s0, %s122
      %p124 = pneg %p34
      %p125 = pneg %p31
      %p126 = pneg %p55
      %p127 = pneg %p52
      %p128 = pneg %p81
      %p129 = pneg %p78
      %s130 = smul.u32 16, %s13
      %p131 = scmp.lt.s32.totalorder %s130, 31
      %s132 = scalar_select %p131, %s130, 31
      %s133 = smul.addr %s132, 4
      %s134 = scalar_lea.vmem %s2, %s133
      %s135 = smul.u32 16, %s13
      %p136 = scmp.lt.s32.totalorder %s135, 31
      %s137 = scalar_select %p136, %s135, 31
      %s138 = smul.addr %s137, 4
      %s139 = scalar_lea.vmem %s0, %s138
      %s140 = smul.u32 16, %s13
      %s141 = smul.u32 16, %s13
      %p142 = scmp.lt.s32.totalorder %s141, 31
      %s143 = scalar_select %p142, %s141, 31
      %s144 = smul.addr %s143, 4
      %s145 = scalar_lea.vmem %s2, %s144
      %s146 = smul.u32 16, %s13
      %v148 = vld [vmem:[%s139] sm:$0xf]
      %v149 = vld [vmem:[%s139 + $0x4] sm:$0xf]
      %v150 = vld [vmem:[%s139 + $0x8] sm:$0xf]
      %v151 = vld [vmem:[%s139 + $0xc] sm:$0xf]
      %v152 = vld [vmem:[%s139 + $0x10] sm:$0xf]
      %v153 = vld [vmem:[%s139 + $0x14] sm:$0xf]
      %v154 = vld [vmem:[%s139 + $0x18] sm:$0xf]
      %v155 = vld [vmem:[%s139 + $0x1c] sm:$0xf]
      %v156 = vld [vmem:[%s139 + $0x20] sm:$0xf]
      %v157 = vld [vmem:[%s139 + $0x24] sm:$0xf]
      %v158 = vld [vmem:[%s139 + $0x28] sm:$0xf]
      %v159 = vld [vmem:[%s139 + $0x2c] sm:$0xf]
      %v160 = vld [vmem:[%s139 + $0x30] sm:$0xf]
      %v161 = vld [vmem:[%s139 + $0x34] sm:$0xf]
      %v162 = vld [vmem:[%s139 + $0x38] sm:$0xf]
      %v163 = vld [vmem:[%s139 + $0x3c] sm:$0xf]
      %v164 = vld [vmem:[%s1] sm:$0xf]
      %v165 = vld [vmem:[%s1 + $0x4] sm:$0xf]
      %v166 = vld [vmem:[%s1 + $0x8] sm:$0xf]
      %v167 = vld [vmem:[%s1 + $0xc] sm:$0xf]
      %v168 = vld [vmem:[%s1 + $0x10] sm:$0xf]
      %v169 = vld [vmem:[%s1 + $0x14] sm:$0xf]
      %v170 = vld [vmem:[%s1 + $0x18] sm:$0xf]
      %v171 = vld [vmem:[%s1 + $0x1c] sm:$0xf]
      %v188 = vunpack.c.l.b16 %v148
      %v189 = vunpack.c.l.b16 %v149
      %v190 = vunpack.c.l.b16 %v150
      %v191 = vunpack.c.l.b16 %v151
      %v192 = vunpack.c.l.b16 %v152
      %v193 = vunpack.c.l.b16 %v153
      %v194 = vunpack.c.l.b16 %v154
      %v195 = vunpack.c.l.b16 %v155
      %v196 = vunpack.c.l.b16 %v156
      %v197 = vunpack.c.l.b16 %v157
      %v198 = vunpack.c.l.b16 %v158
      %v199 = vunpack.c.l.b16 %v159
      %v200 = vunpack.c.l.b16 %v160
      %v201 = vunpack.c.l.b16 %v161
      %v202 = vunpack.c.l.b16 %v162
      %v203 = vunpack.c.l.b16 %v163
      %v204 = vpack.c.b16 %v189, %v188
      %v205 = vpack.c.b16 %v191, %v190
      %v206 = vpack.c.b16 %v193, %v192
      %v207 = vpack.c.b16 %v195, %v194
      %v208 = vpack.c.b16 %v197, %v196
      %v209 = vpack.c.b16 %v199, %v198
      %v210 = vpack.c.b16 %v201, %v200
      %v211 = vpack.c.b16 %v203, %v202
      %v220 = vunpack.c.l.b16 %v164
      %v221 = vunpack.c.l.b16 %v165
      %v222 = vunpack.c.l.b16 %v166
      %v223 = vunpack.c.l.b16 %v167
      %v224 = vunpack.c.l.b16 %v168
      %v225 = vunpack.c.l.b16 %v169
      %v226 = vunpack.c.l.b16 %v170
      %v227 = vunpack.c.l.b16 %v171
      %v228 = vpack.c.b16 %v221, %v220
      %v229 = vpack.c.b16 %v223, %v222
      %v230 = vpack.c.b16 %v225, %v224
      %v231 = vpack.c.b16 %v227, %v226
      %vm236 = vcmask 523264
      %v238 = vsel %vm236, %v204, 0
      %v241 = vsel %vm236, %v205, 0
      %v244 = vsel %vm236, %v206, 0
      %v247 = vsel %vm236, %v207, 0
      %v250 = vsel %vm236, %v208, 0
      %v253 = vsel %vm236, %v209, 0
      %v256 = vsel %vm236, %v210, 0
      %v259 = vsel %vm236, %v211, 0
      %261 = vmatprep.subr.bf16.mxu0 0
      %262 = vmatpush1.bf16.msra.mxu0 %v228
      %263 = vmatprep.subr.bf16.mxu0 0
      %264 = vmatpush1.bf16.msra.mxu0 %v229
      %265 = vmatprep.subr.bf16.mxu0 0
      %266 = vmatpush1.bf16.msra.mxu0 %v230
      %267 = vmatprep.subr.bf16.mxu0 0
      %268 = vmatpush1.bf16.msra.mxu0 %v231
      %269 = vmatprep.subr.bf16.mxu0 0
      %270 = vmatpush1.bf16.msra.mxu0 0
      %271 = vmatprep.subr.bf16.mxu0 0
      %272 = vmatpush1.bf16.msra.mxu0 0
      %273 = vmatprep.subr.bf16.mxu0 0
      %274 = vmatpush1.bf16.msra.mxu0 0
      %275 = vmatprep.subr.bf16.mxu0 0
      %276 = vmatpush1.bf16.msra.mxu0 0
      %277 = vmatprep.subr.bf16.mxu0 0
      %278 = vmatpush1.bf16.msra.mxu0 0
      %279 = vmatprep.subr.bf16.mxu0 0
      %280 = vmatpush1.bf16.msra.mxu0 0
      %281 = vmatprep.subr.bf16.mxu0 0
      %282 = vmatpush1.bf16.msra.mxu0 0
      %283 = vmatprep.subr.bf16.mxu0 0
      %284 = vmatpush1.bf16.msra.mxu0 0
      %285 = vmatprep.subr.bf16.mxu0 0
      %286 = vmatpush1.bf16.msra.mxu0 0
      %287 = vmatprep.subr.bf16.mxu0 0
      %288 = vmatpush1.bf16.msra.mxu0 0
      %289 = vmatprep.subr.bf16.mxu0 0
      %290 = vmatpush1.bf16.msra.mxu0 0
      %291 = vmatprep.subr.bf16.mxu0 0
      %292 = vmatpush1.bf16.msra.mxu0 0
      %293 = vmatprep.mubr.bf16.mxu0 0
      %294 = vmatmul.mubr.bf16.gmra.mrb[0].mxu0 %v238
      %v295 = vpop.f32.mrb[0].mxu0
      %v296 = vadd.f32 0.0, %v295
      %v297 = vpop.f32.mrb[0].mxu0
      %v298 = vpop.f32.mrb[0].mxu0
      %v299 = vadd.f32 0.0, %v298
      %v300 = vpop.f32.mrb[0].mxu0
      %301 = vmatprep.mubr.bf16.mxu0 0
      %302 = vmatmul.mubr.bf16.gmra.mrb[0].mxu0 %v241
      %v303 = vpop.f32.mrb[0].mxu0
      %v304 = vadd.f32 0.0, %v303
      %v305 = vpop.f32.mrb[0].mxu0
      %v306 = vpop.f32.mrb[0].mxu0
      %v307 = vadd.f32 0.0, %v306
      %v308 = vpop.f32.mrb[0].mxu0
      %309 = vmatprep.mubr.bf16.mxu0 0
      %310 = vmatmul.mubr.bf16.gmra.mrb[0].mxu0 %v244
      %v311 = vpop.f32.mrb[0].mxu0
      %v312 = vadd.f32 0.0, %v311
      %v313 = vpop.f32.mrb[0].mxu0
      %v314 = vpop.f32.mrb[0].mxu0
      %v315 = vadd.f32 0.0, %v314
      %v316 = vpop.f32.mrb[0].mxu0
      %317 = vmatprep.mubr.bf16.mxu0 0
      %318 = vmatmul.mubr.bf16.gmra.mrb[0].mxu0 %v247
      %v319 = vpop.f32.mrb[0].mxu0
      %v320 = vadd.f32 0.0, %v319
      %v321 = vpop.f32.mrb[0].mxu0
      %v322 = vpop.f32.mrb[0].mxu0
      %v323 = vadd.f32 0.0, %v322
      %v324 = vpop.f32.mrb[0].mxu0
      %325 = vmatprep.mubr.bf16.mxu0 0
      %326 = vmatmul.mubr.bf16.gmra.mrb[0].mxu0 %v250
      %v327 = vpop.f32.mrb[0].mxu0
      %v328 = vadd.f32 0.0, %v327
      %v329 = vpop.f32.mrb[0].mxu0
      %v330 = vpop.f32.mrb[0].mxu0
      %v331 = vadd.f32 0.0, %v330
      %v332 = vpop.f32.mrb[0].mxu0
      %333 = vmatprep.mubr.bf16.mxu0 0
      %334 = vmatmul.mubr.bf16.gmra.mrb[0].mxu0 %v253
      %v335 = vpop.f32.mrb[0].mxu0
      %v336 = vadd.f32 0.0, %v335
      %v337 = vpop.f32.mrb[0].mxu0
      %v338 = vpop.f32.mrb[0].mxu0
      %v339 = vadd.f32 0.0, %v338
      %v340 = vpop.f32.mrb[0].mxu0
      %341 = vmatprep.mubr.bf16.mxu0 0
      %342 = vmatmul.mubr.bf16.gmra.mrb[0].mxu0 %v256
      %v343 = vpop.f32.mrb[0].mxu0
      %v344 = vadd.f32 0.0, %v343
      %v345 = vpop.f32.mrb[0].mxu0
      %v346 = vpop.f32.mrb[0].mxu0
      %v347 = vadd.f32 0.0, %v346
      %v348 = vpop.f32.mrb[0].mxu0
      %349 = vmatprep.mubr.bf16.mxu0 0
      %350 = vmatmul.mubr.bf16.gmra.mrb[0].mxu0 %v259
      %v351 = vpop.f32.mrb[0].mxu0
      %v352 = vadd.f32 0.0, %v351
      %v353 = vpop.f32.mrb[0].mxu0
      %v354 = vpop.f32.mrb[0].mxu0
      %v355 = vadd.f32 0.0, %v354
      %v356 = vpop.f32.mrb[0].mxu0
      %357 = vdwg.mxu0
      %v358 = vpack.c.bf16 %v299, %v296
      %v359 = vpack.c.bf16 %v307, %v304
      %v360 = vpack.c.bf16 %v315, %v312
      %v361 = vpack.c.bf16 %v323, %v320
      %v362 = vpack.c.bf16 %v331, %v328
      %v363 = vpack.c.bf16 %v339, %v336
      %v364 = vpack.c.bf16 %v347, %v344
      %v365 = vpack.c.bf16 %v355, %v352
      %v374 = vunpack.c.l.b16 %v358
      %v375 = vunpack.c.h.b16 %v358
      %v376 = vunpack.c.l.b16 %v359
      %v377 = vunpack.c.h.b16 %v359
      %v378 = vunpack.c.l.b16 %v360
      %v379 = vunpack.c.h.b16 %v360
      %v380 = vunpack.c.l.b16 %v361
      %v381 = vunpack.c.h.b16 %v361
      %v382 = vunpack.c.l.b16 %v362
      %v383 = vunpack.c.h.b16 %v362
      %v384 = vunpack.c.l.b16 %v363
      %v385 = vunpack.c.h.b16 %v363
      %v386 = vunpack.c.l.b16 %v364
      %v387 = vunpack.c.h.b16 %v364
      %v388 = vunpack.c.l.b16 %v365
      %v389 = vunpack.c.h.b16 %v365
      %v390 = vpack.c.b16 %v374, %v374
      %v391 = vpack.c.b16 %v375, %v375
      %v392 = vpack.c.b16 %v376, %v376
      %v393 = vpack.c.b16 %v377, %v377
      %v394 = vpack.c.b16 %v378, %v378
      %v395 = vpack.c.b16 %v379, %v379
      %v396 = vpack.c.b16 %v380, %v380
      %v397 = vpack.c.b16 %v381, %v381
      %v398 = vpack.c.b16 %v382, %v382
      %v399 = vpack.c.b16 %v383, %v383
      %v400 = vpack.c.b16 %v384, %v384
      %v401 = vpack.c.b16 %v385, %v385
      %v402 = vpack.c.b16 %v386, %v386
      %v403 = vpack.c.b16 %v387, %v387
      %v404 = vpack.c.b16 %v388, %v388
      %v405 = vpack.c.b16 %v389, %v389
      %422 = vst [vmem:[%s145] sm:$0xf] %v390
      %423 = vst [vmem:[%s145 + $0x4] sm:$0xf] %v391
      %424 = vst [vmem:[%s145 + $0x8] sm:$0xf] %v392
      %425 = vst [vmem:[%s145 + $0xc] sm:$0xf] %v393
      %426 = vst [vmem:[%s145 + $0x10] sm:$0xf] %v394
      %427 = vst [vmem:[%s145 + $0x14] sm:$0xf] %v395
      %428 = vst [vmem:[%s145 + $0x18] sm:$0xf] %v396
      %429 = vst [vmem:[%s145 + $0x1c] sm:$0xf] %v397
      %430 = vst [vmem:[%s145 + $0x20] sm:$0xf] %v398
      %431 = vst [vmem:[%s145 + $0x24] sm:$0xf] %v399
      %432 = vst [vmem:[%s145 + $0x28] sm:$0xf] %v400
      %433 = vst [vmem:[%s145 + $0x2c] sm:$0xf] %v401
      %434 = vst [vmem:[%s145 + $0x30] sm:$0xf] %v402
      %435 = vst [vmem:[%s145 + $0x34] sm:$0xf] %v403
      %436 = vst [vmem:[%s145 + $0x38] sm:$0xf] %v404
      %437 = vst [vmem:[%s145 + $0x3c] sm:$0xf] %v405
      %s438 = smul.u32 16, %s13
      %p439 = scmp.lt.s32.totalorder %s438, 31
      %s440 = scalar_select %p439, %s438, 31
      %s441 = smul.addr %s440, 4
      %s442 = scalar_lea.vmem %s2, %s441
      // Predicated region
      $region29: #{gcn_model_ae_forward.5} parent=27 // pred_check
        %p443 = pneg %p78
      $region30: #{gcn_model_ae_forward.5} parent=27 // pred_check_branch
        %445 = sbr.rel (%p443) target = $region32
      $region31: #{gcn_model_ae_forward.5} parent=27 // pred_region
        %s446 = smul.u32 16, %s13
      $region32: #{gcn_model_ae_forward.5} parent=27 // pred_fallthru
        _
    $region28: #{gcn_model_ae_forward.5} parent=5 // pred_fallthru
      _
    %p447 = scmp.le.s32.totalorder 2, %s8
    // Predicated region
    $region33: #{gcn_model_ae_forward.5} parent=5 // pred_check
      %p448 = pneg %p447
    $region34: #{gcn_model_ae_forward.5} parent=5 // pred_check_branch
      %450 = sbr.rel (%p448) target = $region36
    $region35: #{gcn_model_ae_forward.5} parent=5 // pred_region
      %s451 = ssub.s32 %s8, 2
      // Predicated region
      $region37: #{gcn_model_ae_forward.5} parent=35 // pred_check
        %p452 = pneg %p84
      $region38: #{gcn_model_ae_forward.5} parent=35 // pred_check_branch
        %454 = sbr.rel (%p452) target = $region40
      $region39: #{gcn_model_ae_forward.5} parent=35 // pred_region
        %s455 = smul.u32 16, %s14
        %p456 = scmp.lt.s32.totalorder %s455, 31
        %s457 = scalar_select %p456, %s455, 31
        %s458 = smul.addr %s457, 4
        %s459 = scalar_lea.vmem %s2, %s458
      $region40: #{gcn_model_ae_forward.5} parent=35 // pred_fallthru
        _
    $region36: #{gcn_model_ae_forward.5} parent=5 // pred_fallthru
      _
  $region6: #{gcn_model_ae_forward.5} parent=0 // loop_footer
    %s12 = sadd.s32 1, %s8
  $region7: #{gcn_model_ae_forward.5} parent=0 // loop_footer_branch
    %7 = sbr.rel target = $region3
  $region8: #{gcn_model_ae_forward.5} parent=0 // loop_exit
    _

// kernel: gcn_model_ae_forward.8
$region0: #{gcn_model_ae_forward.8}
  #allocation0 [shape = 'u32[]', space=smem, size = 0x4, offset = 0x4, fixed_abs, tag = 'smem constant byte address 0x4 - core index']
  #allocation1 [shape = 'u32[144,128]{1,0:T(1,128)}', space=vmem, size = 0x12000, scoped, tag = 'internal scratch']
  #allocation2 [shape = 'f32[128,128]{1,0:T(8,128)}', space=vmem, size = 0x10000, scoped, tag = 'scratch operand']
  %s0 = inlined_call_operand.vmem [shape: bf16[256,256], index: 0, kind: input, shape index: {}]
  %s1 = inlined_call_operand.vmem [shape: bf16[256,128], index: 1, kind: input, shape index: {}]
  %s2 = inlined_call_operand.vmem [shape: f32[256,128], index: 2, kind: output, shape index: {}]
  %s3 = sld [smem:[#allocation0]]
  $region49: #{gcn_model_ae_forward.8} parent=0
    _
  %s5 = ssub.s32 1, %s3
  %s6 = scalar_select 0, %s5, %s3
  loop: start=0, step=1, limit=4
  $region2: #{gcn_model_ae_forward.8} parent=0 // loop_pre_header
    _
  $region3: #{gcn_model_ae_forward.8} parent=0 // loop_header
    %s8 = sphi 0, %s12
    %p9 = scmp.ge.s32.totalorder %s8, 4
    %s15 = sphi 0, %s27
    %s16 = sphi 0, %s23
    %s17 = sphi 0, %s15
    %s18 = sphi 0, %s16
    %s19 = sphi 0, %s17
    %s20 = sphi 0, %s18
    %s32 = sphi 0, %s34
    %s35 = sphi 0, %s32
    %s36 = sphi 0, %s35
    %s52 = sphi 0, %s36
    %s56 = sphi 0, %s56
    %s58 = sphi 0, %s56
    %s59 = sphi 0, %s58
    %s73 = sphi 0, %s59
    %s79 = sphi 0, %s81
    %s82 = sphi 0, %s79
    %s83 = sphi 0, %s82
    %s99 = sphi 0, %s83
  $region4: #{gcn_model_ae_forward.8} parent=0 // loop_header_branch
    %11 = sbr.rel (%p9) target = $region8
  $region5: #{gcn_model_ae_forward.8} parent=0 // loop_body
    %s13 = ssub.s32 %s8, 1
    %s14 = ssub.s32 %s8, 2
    %s21 = sadd.s32 1, %s16
    %p22 = scmp.ge.s32.totalorder %s21, 1
    %s23 = scalar_select %p22, 0, %s21
    %s24 = sadd.s32 1, %s15
    %s25 = scalar_select %p22, %s24, %s15
    %p26 = scmp.ge.s32.totalorder %s25, 2
    %s27 = scalar_select %p26, 0, %s25
    %s28 = ssub.s32 %s15, %s27
    %s29 = ssub.s32 %s16, %s23
    %s30 = sor.u32 %s28, %s29
    %p31 = scmp.eq.s32.totalorder %s30, 0
    %s33 = sadd.s32 %s32, 1
    %s34 = scalar_select %p31, %s32, %s33
    %p37 = pneg %p31
    %p38 = scmp.eq.s32.totalorder %s8, 1
    %p39 = por %p37, %p38
    %p40 = scmp.ne.s32.totalorder %s32, %s35
    %p41 = scmp.eq.s32.totalorder %s8, 0
    %p42 = por %p40, %p41
    %p43 = scmp.ne.s32.totalorder %s32, %s35
    %p44 = scmp.eq.s32.totalorder %s13, 1
    %p45 = por %p43, %p44
    %p46 = scmp.ne.s32.totalorder %s35, %s36
    %p47 = scmp.eq.s32.totalorder %s13, 0
    %p48 = por %p46, %p47
    %p49 = scmp.ne.s32.totalorder %s35, %s36
    %p50 = scmp.eq.s32.totalorder %s14, 1
    %p51 = por %p49, %p50
    %p53 = scmp.ne.s32.totalorder %s36, %s52
    %p54 = scmp.eq.s32.totalorder %s14, 0
    %p55 = por %p53, %p54
    %s57 = sadd.s32 %s56, 1
    %p60 = scmp.eq.s32.totalorder %s8, 1
    %p61 = scmp.ne.s32.totalorder %s56, %s58
    %p62 = scmp.eq.s32.totalorder %s8, 0
    %p63 = por %p61, %p62
    %p64 = scmp.ne.s32.totalorder %s56, %s58
    %p65 = scmp.eq.s32.totalorder %s13, 1
    %p66 = por %p64, %p65
    %p67 = scmp.ne.s32.totalorder %s58, %s59
    %p68 = scmp.eq.s32.totalorder %s13, 0
    %p69 = por %p67, %p68
    %p70 = scmp.ne.s32.totalorder %s58, %s59
    %p71 = scmp.eq.s32.totalorder %s14, 1
    %p72 = por %p70, %p71
    %p74 = scmp.ne.s32.totalorder %s59, %s73
    %p75 = scmp.eq.s32.totalorder %s14, 0
    %p76 = por %p74, %p75
    %s77 = ssub.s32 %s15, %s27
    %p78 = scmp.eq.s32.totalorder %s77, 0
    %s80 = sadd.s32 %s79, 1
    %s81 = scalar_select %p78, %s79, %s80
    %p84 = pneg %p78
    %p85 = scmp.eq.s32.totalorder %s8, 1
    %p86 = por %p84, %p85
    %p87 = scmp.ne.s32.totalorder %s79, %s82
    %p88 = scmp.eq.s32.totalorder %s8, 0
    %p89 = por %p87, %p88
    %p90 = scmp.ne.s32.totalorder %s79, %s82
    %p91 = scmp.eq.s32.totalorder %s13, 1
    %p92 = por %p90, %p91
    %p93 = scmp.ne.s32.totalorder %s82, %s83
    %p94 = scmp.eq.s32.totalorder %s13, 0
    %p95 = por %p93, %p94
    %p96 = scmp.ne.s32.totalorder %s82, %s83
    %p97 = scmp.eq.s32.totalorder %s14, 1
    %p98 = por %p96, %p97
    %p100 = scmp.ne.s32.totalorder %s83, %s99
    %p101 = scmp.eq.s32.totalorder %s14, 0
    %p102 = por %p100, %p101
    %p103 = scmp.le.s32.totalorder 1, %s8
    %p104 = scmp.lt.s32.totalorder %s8, 3
    %p105 = pnand %p103, %p104
    %p106 = pneg %p105
    // Predicated region
    $region9: #{gcn_model_ae_forward.8} parent=5 // pred_check
      _
    $region10: #{gcn_model_ae_forward.8} parent=5 // pred_check_branch
      %108 = sbr.rel (%p105) target = $region12
    $region11: #{gcn_model_ae_forward.8} parent=5 // pred_region
      %s109 = ssub.s32 %s8, 1
      // Predicated region
      $region13: #{gcn_model_ae_forward.8} parent=11 // pred_check
        %p110 = pneg %p69
      $region14: #{gcn_model_ae_forward.8} parent=11 // pred_check_branch
        %112 = sbr.rel (%p110) target = $region16
      $region15: #{gcn_model_ae_forward.8} parent=11 // pred_region
        _
      $region16: #{gcn_model_ae_forward.8} parent=11 // pred_fallthru
        _
    $region12: #{gcn_model_ae_forward.8} parent=5 // pred_fallthru
      _
    %p113 = scmp.lt.s32.totalorder %s8, 2
    // Predicated region
    $region17: #{gcn_model_ae_forward.8} parent=5 // pred_check
      %p114 = pneg %p113
    $region18: #{gcn_model_ae_forward.8} parent=5 // pred_check_branch
      %116 = sbr.rel (%p114) target = $region20
    $region19: #{gcn_model_ae_forward.8} parent=5 // pred_region
      // Predicated region
      $region21: #{gcn_model_ae_forward.8} parent=19 // pred_check
        %p117 = pneg %p42
      $region22: #{gcn_model_ae_forward.8} parent=19 // pred_check_branch
        %119 = sbr.rel (%p117) target = $region24
      $region23: #{gcn_model_ae_forward.8} parent=19 // pred_region
        %s120 = smul.u32 16, %s15
        %s121 = smul.u32 2, %s16
        %p122 = scmp.lt.s32.totalorder %s120, 31
        %s123 = scalar_select %p122, %s120, 31
        %p124 = scmp.lt.s32.totalorder %s121, 1
        %s125 = scalar_select %p124, %s121, 1
        %s126 = smul.addr %s123, 2
        %s127 = sadd.s32 %s125, %s126
        %s128 = smul.addr %s127, 4
        %s129 = scalar_lea.vmem %s0, %s128
        %s130 = smul.u32 16, %s15
        %s131 = smul.u32 2, %s16
      $region24: #{gcn_model_ae_forward.8} parent=19 // pred_fallthru
        _
    $region20: #{gcn_model_ae_forward.8} parent=5 // pred_fallthru
      _
    %p132 = scmp.le.s32.totalorder 1, %s8
    %p133 = scmp.lt.s32.totalorder %s8, 3
    %p134 = pnand %p132, %p133
    %p135 = pneg %p134
    // Predicated region
    $region25: #{gcn_model_ae_forward.8} parent=5 // pred_check
      _
    $region26: #{gcn_model_ae_forward.8} parent=5 // pred_check_branch
      %137 = sbr.rel (%p134) target = $region28
    $region27: #{gcn_model_ae_forward.8} parent=5 // pred_region
      %s138 = ssub.s32 %s8, 1
      %s139 = smul.u32 16, %s17
      %s140 = smul.u32 2, %s18
      %p141 = scmp.lt.s32.totalorder %s139, 31
      %s142 = scalar_select %p141, %s139, 31
      %p143 = scmp.lt.s32.totalorder %s140, 1
      %s144 = scalar_select %p143, %s140, 1
      %s145 = smul.addr %s142, 2
      %s146 = sadd.s32 %s144, %s145
      %s147 = smul.addr %s146, 4
      %s148 = scalar_lea.vmem %s0, %s147
      %p149 = pneg %p48
      %p150 = pneg %p45
      %p151 = pneg %p69
      %p152 = pneg %p66
      %p153 = pneg %p95
      %p154 = pneg %p92
      %s155 = smul.u32 16, %s17
      %p156 = scmp.lt.s32.totalorder %s155, 31
      %s157 = scalar_select %p156, %s155, 31
      %s158 = smul.addr %s157, 8
      %s159 = scalar_lea.vmem %s2, %s158
      %s160 = smul.u32 16, %s17
      %s161 = smul.u32 2, %s18
      %p162 = scmp.lt.s32.totalorder %s160, 31
      %s163 = scalar_select %p162, %s160, 31
      %p164 = scmp.lt.s32.totalorder %s161, 1
      %s165 = scalar_select %p164, %s161, 1
      %s166 = smul.addr %s163, 2
      %s167 = sadd.s32 %s165, %s166
      %s168 = smul.addr %s167, 4
      %s169 = scalar_lea.vmem %s0, %s168
      %s170 = smul.u32 16, %s17
      %s171 = smul.u32 2, %s18
      %s172 = smul.u32 16, %s17
      %p173 = scmp.lt.s32.totalorder %s172, 31
      %s174 = scalar_select %p173, %s172, 31
      %s175 = smul.addr %s174, 8
      %s176 = scalar_lea.vmem %s2, %s175
      %s177 = smul.u32 16, %s17
      %p179 = scmp.eq.s32.totalorder %s18, 0
      // Predicated region
      $region29: #{gcn_model_ae_forward.8} parent=27 // pred_check
        %p180 = pneg %p179
      $region30: #{gcn_model_ae_forward.8} parent=27 // pred_check_branch
        %182 = sbr.rel (%p180) target = $region32
      $region31: #{gcn_model_ae_forward.8} parent=27 // pred_region
        %183 = vst [vmem:[#allocation2] sm:$0xff] 0.0
        %184 = vst [vmem:[#allocation2 + $0x8] sm:$0xff] 0.0
        %185 = vst [vmem:[#allocation2 + $0x10] sm:$0xff] 0.0
        %186 = vst [vmem:[#allocation2 + $0x18] sm:$0xff] 0.0
        %187 = vst [vmem:[#allocation2 + $0x20] sm:$0xff] 0.0
        %188 = vst [vmem:[#allocation2 + $0x28] sm:$0xff] 0.0
        %189 = vst [vmem:[#allocation2 + $0x30] sm:$0xff] 0.0
        %190 = vst [vmem:[#allocation2 + $0x38] sm:$0xff] 0.0
        %191 = vst [vmem:[#allocation2 + $0x40] sm:$0xff] 0.0
        %192 = vst [vmem:[#allocation2 + $0x48] sm:$0xff] 0.0
        %193 = vst [vmem:[#allocation2 + $0x50] sm:$0xff] 0.0
        %194 = vst [vmem:[#allocation2 + $0x58] sm:$0xff] 0.0
        %195 = vst [vmem:[#allocation2 + $0x60] sm:$0xff] 0.0
        %196 = vst [vmem:[#allocation2 + $0x68] sm:$0xff] 0.0
        %197 = vst [vmem:[#allocation2 + $0x70] sm:$0xff] 0.0
        %198 = vst [vmem:[#allocation2 + $0x78] sm:$0xff] 0.0
      $region32: #{gcn_model_ae_forward.8} parent=27 // pred_fallthru
        _
      %s199 = smul.u32 %s18, 256
      %v200 = vld [vmem:[%s169] sm:$0xff]
      %v201 = vld [vmem:[%s169 + $0x8] sm:$0xff]
      %v202 = vld [vmem:[%s169 + $0x10] sm:$0xff]
      %v203 = vld [vmem:[%s169 + $0x18] sm:$0xff]
      %v204 = vld [vmem:[%s169 + $0x20] sm:$0xff]
      %v205 = vld [vmem:[%s169 + $0x28] sm:$0xff]
      %v206 = vld [vmem:[%s169 + $0x30] sm:$0xff]
      %v207 = vld [vmem:[%s169 + $0x38] sm:$0xff]
      %v208 = vld [vmem:[%s169 + $0x40] sm:$0xff]
      %v209 = vld [vmem:[%s169 + $0x48] sm:$0xff]
      %v210 = vld [vmem:[%s169 + $0x50] sm:$0xff]
      %v211 = vld [vmem:[%s169 + $0x58] sm:$0xff]
      %v212 = vld [vmem:[%s169 + $0x60] sm:$0xff]
      %v213 = vld [vmem:[%s169 + $0x68] sm:$0xff]
      %v214 = vld [vmem:[%s169 + $0x70] sm:$0xff]
      %v215 = vld [vmem:[%s169 + $0x78] sm:$0xff]
      %v216 = vld [vmem:[#allocation2] sm:$0xff]
      %v217 = vld [vmem:[#allocation2 + $0x8] sm:$0xff]
      %v218 = vld [vmem:[#allocation2 + $0x10] sm:$0xff]
      %v219 = vld [vmem:[#allocation2 + $0x18] sm:$0xff]
      %v220 = vld [vmem:[#allocation2 + $0x20] sm:$0xff]
      %v221 = vld [vmem:[#allocation2 + $0x28] sm:$0xff]
      %v222 = vld [vmem:[#allocation2 + $0x30] sm:$0xff]
      %v223 = vld [vmem:[#allocation2 + $0x38] sm:$0xff]
      %v224 = vld [vmem:[#allocation2 + $0x40] sm:$0xff]
      %v225 = vld [vmem:[#allocation2 + $0x48] sm:$0xff]
      %v226 = vld [vmem:[#allocation2 + $0x50] sm:$0xff]
      %v227 = vld [vmem:[#allocation2 + $0x58] sm:$0xff]
      %v228 = vld [vmem:[#allocation2 + $0x60] sm:$0xff]
      %v229 = vld [vmem:[#allocation2 + $0x68] sm:$0xff]
      %v230 = vld [vmem:[#allocation2 + $0x70] sm:$0xff]
      %v231 = vld [vmem:[#allocation2 + $0x78] sm:$0xff]
      %s232 = sshra.s32 %s199, 3
      %s233 = sand.u32 %s199, 7
      %s234 = smul.addr %s232, 4
      %s235 = scalar_lea.vmem %s1, %s234
      %v236 = vld [vmem:[%s235] sm:$0xf]
      %v237 = vld [vmem:[%s235 + $0x4] sm:$0xf]
      %v238 = vld [vmem:[%s235 + $0x8] sm:$0xf]
      %v239 = vld [vmem:[%s235 + $0xc] sm:$0xf]
      %v240 = vld [vmem:[%s235 + $0x10] sm:$0xf]
      %v241 = vld [vmem:[%s235 + $0x14] sm:$0xf]
      %v242 = vld [vmem:[%s235 + $0x18] sm:$0xf]
      %v243 = vld [vmem:[%s235 + $0x1c] sm:$0xf]
      %v244 = vld [vmem:[%s235 + $0x20] sm:$0xf]
      %v245 = vld [vmem:[%s235 + $0x24] sm:$0xf]
      %v246 = vld [vmem:[%s235 + $0x28] sm:$0xf]
      %v247 = vld [vmem:[%s235 + $0x2c] sm:$0xf]
      %v248 = vld [vmem:[%s235 + $0x30] sm:$0xf]
      %v249 = vld [vmem:[%s235 + $0x34] sm:$0xf]
      %v250 = vld [vmem:[%s235 + $0x38] sm:$0xf]
      %v251 = vld [vmem:[%s235 + $0x3c] sm:$0xf]
      %v252 = vld [vmem:[%s235 + $0x40] sm:$0xf]
      %v253 = vld [vmem:[%s235 + $0x44] sm:$0xf]
      %v254 = vld [vmem:[%s235 + $0x48] sm:$0xf]
      %v255 = vld [vmem:[%s235 + $0x4c] sm:$0xf]
      %v256 = vld [vmem:[%s235 + $0x50] sm:$0xf]
      %v257 = vld [vmem:[%s235 + $0x54] sm:$0xf]
      %v258 = vld [vmem:[%s235 + $0x58] sm:$0xf]
      %v259 = vld [vmem:[%s235 + $0x5c] sm:$0xf]
      %v260 = vld [vmem:[%s235 + $0x60] sm:$0xf]
      %v261 = vld [vmem:[%s235 + $0x64] sm:$0xf]
      %v262 = vld [vmem:[%s235 + $0x68] sm:$0xf]
      %v263 = vld [vmem:[%s235 + $0x6c] sm:$0xf]
      %v264 = vld [vmem:[%s235 + $0x70] sm:$0xf]
      %v265 = vld [vmem:[%s235 + $0x74] sm:$0xf]
      %v266 = vld [vmem:[%s235 + $0x78] sm:$0xf]
      %v267 = vld [vmem:[%s235 + $0x7c] sm:$0xf]
      %v284 = vunpack.c.l.b16 %v200
      %v285 = vunpack.c.h.b16 %v200
      %v286 = vunpack.c.l.b16 %v201
      %v287 = vunpack.c.h.b16 %v201
      %v288 = vunpack.c.l.b16 %v202
      %v289 = vunpack.c.h.b16 %v202
      %v290 = vunpack.c.l.b16 %v203
      %v291 = vunpack.c.h.b16 %v203
      %v292 = vunpack.c.l.b16 %v204
      %v293 = vunpack.c.h.b16 %v204
      %v294 = vunpack.c.l.b16 %v205
      %v295 = vunpack.c.h.b16 %v205
      %v296 = vunpack.c.l.b16 %v206
      %v297 = vunpack.c.h.b16 %v206
      %v298 = vunpack.c.l.b16 %v207
      %v299 = vunpack.c.h.b16 %v207
      %v300 = vunpack.c.l.b16 %v208
      %v301 = vunpack.c.h.b16 %v208
      %v302 = vunpack.c.l.b16 %v209
      %v303 = vunpack.c.h.b16 %v209
      %v304 = vunpack.c.l.b16 %v210
      %v305 = vunpack.c.h.b16 %v210
      %v306 = vunpack.c.l.b16 %v211
      %v307 = vunpack.c.h.b16 %v211
      %v308 = vunpack.c.l.b16 %v212
      %v309 = vunpack.c.h.b16 %v212
      %v310 = vunpack.c.l.b16 %v213
      %v311 = vunpack.c.h.b16 %v213
      %v312 = vunpack.c.l.b16 %v214
      %v313 = vunpack.c.h.b16 %v214
      %v314 = vunpack.c.l.b16 %v215
      %v315 = vunpack.c.h.b16 %v215
      %v316 = vpack.c.b16 %v286, %v284
      %v317 = vpack.c.b16 %v287, %v285
      %v318 = vpack.c.b16 %v290, %v288
      %v319 = vpack.c.b16 %v291, %v289
      %v320 = vpack.c.b16 %v294, %v292
      %v321 = vpack.c.b16 %v295, %v293
      %v322 = vpack.c.b16 %v298, %v296
      %v323 = vpack.c.b16 %v299, %v297
      %v324 = vpack.c.b16 %v302, %v300
      %v325 = vpack.c.b16 %v303, %v301
      %v326 = vpack.c.b16 %v306, %v304
      %v327 = vpack.c.b16 %v307, %v305
      %v328 = vpack.c.b16 %v310, %v308
      %v329 = vpack.c.b16 %v311, %v309
      %v330 = vpack.c.b16 %v314, %v312
      %v331 = vpack.c.b16 %v315, %v313
      %v380 = vunpack.c.l.b16 %v236
      %v381 = vunpack.c.l.b16 %v237
      %v382 = vunpack.c.l.b16 %v238
      %v383 = vunpack.c.l.b16 %v239
      %v384 = vunpack.c.l.b16 %v240
      %v385 = vunpack.c.l.b16 %v241
      %v386 = vunpack.c.l.b16 %v242
      %v387 = vunpack.c.l.b16 %v243
      %v388 = vunpack.c.l.b16 %v244
      %v389 = vunpack.c.l.b16 %v245
      %v390 = vunpack.c.l.b16 %v246
      %v391 = vunpack.c.l.b16 %v247
      %v392 = vunpack.c.l.b16 %v248
      %v393 = vunpack.c.l.b16 %v249
      %v394 = vunpack.c.l.b16 %v250
      %v395 = vunpack.c.l.b16 %v251
      %v396 = vunpack.c.l.b16 %v252
      %v397 = vunpack.c.l.b16 %v253
      %v398 = vunpack.c.l.b16 %v254
      %v399 = vunpack.c.l.b16 %v255
      %v400 = vunpack.c.l.b16 %v256
      %v401 = vunpack.c.l.b16 %v257
      %v402 = vunpack.c.l.b16 %v258
      %v403 = vunpack.c.l.b16 %v259
      %v404 = vunpack.c.l.b16 %v260
      %v405 = vunpack.c.l.b16 %v261
      %v406 = vunpack.c.l.b16 %v262
      %v407 = vunpack.c.l.b16 %v263
      %v408 = vunpack.c.l.b16 %v264
      %v409 = vunpack.c.l.b16 %v265
      %v410 = vunpack.c.l.b16 %v266
      %v411 = vunpack.c.l.b16 %v267
      %v412 = vpack.c.b16 %v381, %v380
      %v413 = vpack.c.b16 %v383, %v382
      %v414 = vpack.c.b16 %v385, %v384
      %v415 = vpack.c.b16 %v387, %v386
      %v416 = vpack.c.b16 %v389, %v388
      %v417 = vpack.c.b16 %v391, %v390
      %v418 = vpack.c.b16 %v393, %v392
      %v419 = vpack.c.b16 %v395, %v394
      %v420 = vpack.c.b16 %v397, %v396
      %v421 = vpack.c.b16 %v399, %v398
      %v422 = vpack.c.b16 %v401, %v400
      %v423 = vpack.c.b16 %v403, %v402
      %v424 = vpack.c.b16 %v405, %v404
      %v425 = vpack.c.b16 %v407, %v406
      %v426 = vpack.c.b16 %v409, %v408
      %v427 = vpack.c.b16 %v411, %v410
      %444 = vmatprep.subr.bf16.mxu0 0
      %445 = vmatpush1.bf16.msra.mxu0 %v412
      %446 = vmatprep.subr.bf16.mxu0 0
      %447 = vmatpush1.bf16.msra.mxu0 %v413
      %448 = vmatprep.subr.bf16.mxu0 0
      %449 = vmatpush1.bf16.msra.mxu0 %v414
      %450 = vmatprep.subr.bf16.mxu0 0
      %451 = vmatpush1.bf16.msra.mxu0 %v415
      %452 = vmatprep.subr.bf16.mxu0 0
      %453 = vmatpush1.bf16.msra.mxu0 %v416
      %454 = vmatprep.subr.bf16.mxu0 0
      %455 = vmatpush1.bf16.msra.mxu0 %v417
      %456 = vmatprep.subr.bf16.mxu0 0
      %457 = vmatpush1.bf16.msra.mxu0 %v418
      %458 = vmatprep.subr.bf16.mxu0 0
      %459 = vmatpush1.bf16.msra.mxu0 %v419
      %460 = vmatprep.subr.bf16.mxu0 0
      %461 = vmatpush1.bf16.msra.mxu0 %v420
      %462 = vmatprep.subr.bf16.mxu0 0
      %463 = vmatpush1.bf16.msra.mxu0 %v421
      %464 = vmatprep.subr.bf16.mxu0 0
      %465 = vmatpush1.bf16.msra.mxu0 %v422
      %466 = vmatprep.subr.bf16.mxu0 0
      %467 = vmatpush1.bf16.msra.mxu0 %v423
      %468 = vmatprep.subr.bf16.mxu0 0
      %469 = vmatpush1.bf16.msra.mxu0 %v424
      %470 = vmatprep.subr.bf16.mxu0 0
      %471 = vmatpush1.bf16.msra.mxu0 %v425
      %472 = vmatprep.subr.bf16.mxu0 0
      %473 = vmatpush1.bf16.msra.mxu0 %v426
      %474 = vmatprep.subr.bf16.mxu0 0
      %475 = vmatpush1.bf16.msra.mxu0 %v427
      %476 = vmatprep.mubr.bf16.mxu0 %v317
      %477 = vmatmul.mubr.bf16.gmra.mrb[0].mxu0 %v316
      %v478 = vpop.f32.mrb[0].mxu0
      %v479 = vadd.f32 0.0, %v478
      %v480 = vpop.f32.mrb[0].mxu0
      %v481 = vpop.f32.mrb[0].mxu0
      %v482 = vadd.f32 0.0, %v481
      %v483 = vpop.f32.mrb[0].mxu0
      %484 = vmatprep.mubr.bf16.mxu0 %v319
      %485 = vmatmul.mubr.bf16.gmra.mrb[0].mxu0 %v318
      %v486 = vpop.f32.mrb[0].mxu0
      %v487 = vadd.f32 0.0, %v486
      %v488 = vpop.f32.mrb[0].mxu0
      %v489 = vpop.f32.mrb[0].mxu0
      %v490 = vadd.f32 0.0, %v489
      %v491 = vpop.f32.mrb[0].mxu0
      %492 = vmatprep.mubr.bf16.mxu0 %v321
      %493 = vmatmul.mubr.bf16.gmra.mrb[0].mxu0 %v320
      %v494 = vpop.f32.mrb[0].mxu0
      %v495 = vadd.f32 0.0, %v494
      %v496 = vpop.f32.mrb[0].mxu0
      %v497 = vpop.f32.mrb[0].mxu0
      %v498 = vadd.f32 0.0, %v497
      %v499 = vpop.f32.mrb[0].mxu0
      %500 = vmatprep.mubr.bf16.mxu0 %v323
      %501 = vmatmul.mubr.bf16.gmra.mrb[0].mxu0 %v322
      %v502 = vpop.f32.mrb[0].mxu0
      %v503 = vadd.f32 0.0, %v502
      %v504 = vpop.f32.mrb[0].mxu0
      %v505 = vpop.f32.mrb[0].mxu0
      %v506 = vadd.f32 0.0, %v505
      %v507 = vpop.f32.mrb[0].mxu0
      %508 = vmatprep.mubr.bf16.mxu0 %v325
      %509 = vmatmul.mubr.bf16.gmra.mrb[0].mxu0 %v324
      %v510 = vpop.f32.mrb[0].mxu0
      %v511 = vadd.f32 0.0, %v510
      %v512 = vpop.f32.mrb[0].mxu0
      %v513 = vpop.f32.mrb[0].mxu0
      %v514 = vadd.f32 0.0, %v513
      %v515 = vpop.f32.mrb[0].mxu0
      %516 = vmatprep.mubr.bf16.mxu0 %v327
      %517 = vmatmul.mubr.bf16.gmra.mrb[0].mxu0 %v326
      %v518 = vpop.f32.mrb[0].mxu0
      %v519 = vadd.f32 0.0, %v518
      %v520 = vpop.f32.mrb[0].mxu0
      %v521 = vpop.f32.mrb[0].mxu0
      %v522 = vadd.f32 0.0, %v521
      %v523 = vpop.f32.mrb[0].mxu0
      %524 = vmatprep.mubr.bf16.mxu0 %v329
      %525 = vmatmul.mubr.bf16.gmra.mrb[0].mxu0 %v328
      %v526 = vpop.f32.mrb[0].mxu0
      %v527 = vadd.f32 0.0, %v526
      %v528 = vpop.f32.mrb[0].mxu0
      %v529 = vpop.f32.mrb[0].mxu0
      %v530 = vadd.f32 0.0, %v529
      %v531 = vpop.f32.mrb[0].mxu0
      %532 = vmatprep.mubr.bf16.mxu0 %v331
      %533 = vmatmul.mubr.bf16.gmra.mrb[0].mxu0 %v330
      %v534 = vpop.f32.mrb[0].mxu0
      %v535 = vadd.f32 0.0, %v534
      %v536 = vpop.f32.mrb[0].mxu0
      %v537 = vpop.f32.mrb[0].mxu0
      %v538 = vadd.f32 0.0, %v537
      %v539 = vpop.f32.mrb[0].mxu0
      %540 = vdwg.mxu0
      %v541 = vadd.f32 %v216, %v479
      %v542 = vadd.f32 %v217, %v482
      %v543 = vadd.f32 %v218, %v487
      %v544 = vadd.f32 %v219, %v490
      %v545 = vadd.f32 %v220, %v495
      %v546 = vadd.f32 %v221, %v498
      %v547 = vadd.f32 %v222, %v503
      %v548 = vadd.f32 %v223, %v506
      %v549 = vadd.f32 %v224, %v511
      %v550 = vadd.f32 %v225, %v514
      %v551 = vadd.f32 %v226, %v519
      %v552 = vadd.f32 %v227, %v522
      %v553 = vadd.f32 %v228, %v527
      %v554 = vadd.f32 %v229, %v530
      %v555 = vadd.f32 %v230, %v535
      %v556 = vadd.f32 %v231, %v538
      %557 = vst [vmem:[#allocation2] sm:$0xff] %v541
      %558 = vst [vmem:[#allocation2 + $0x8] sm:$0xff] %v542
      %559 = vst [vmem:[#allocation2 + $0x10] sm:$0xff] %v543
      %560 = vst [vmem:[#allocation2 + $0x18] sm:$0xff] %v544
      %561 = vst [vmem:[#allocation2 + $0x20] sm:$0xff] %v545
      %562 = vst [vmem:[#allocation2 + $0x28] sm:$0xff] %v546
      %563 = vst [vmem:[#allocation2 + $0x30] sm:$0xff] %v547
      %564 = vst [vmem:[#allocation2 + $0x38] sm:$0xff] %v548
      %565 = vst [vmem:[#allocation2 + $0x40] sm:$0xff] %v549
      %566 = vst [vmem:[#allocation2 + $0x48] sm:$0xff] %v550
      %567 = vst [vmem:[#allocation2 + $0x50] sm:$0xff] %v551
      %568 = vst [vmem:[#allocation2 + $0x58] sm:$0xff] %v552
      %569 = vst [vmem:[#allocation2 + $0x60] sm:$0xff] %v553
      %570 = vst [vmem:[#allocation2 + $0x68] sm:$0xff] %v554
      %571 = vst [vmem:[#allocation2 + $0x70] sm:$0xff] %v555
      %572 = vst [vmem:[#allocation2 + $0x78] sm:$0xff] %v556
      // Predicated region
      $region33: #{gcn_model_ae_forward.8} parent=27 // pred_check
        %p573 = pneg %p179
      $region34: #{gcn_model_ae_forward.8} parent=27 // pred_check_branch
        %575 = sbr.rel (%p573) target = $region36
      $region35: #{gcn_model_ae_forward.8} parent=27 // pred_region
        %v576 = vld [vmem:[#allocation2] sm:$0xff]
        %v577 = vld [vmem:[#allocation2 + $0x8] sm:$0xff]
        %v578 = vld [vmem:[#allocation2 + $0x10] sm:$0xff]
        %v579 = vld [vmem:[#allocation2 + $0x18] sm:$0xff]
        %v580 = vld [vmem:[#allocation2 + $0x20] sm:$0xff]
        %v581 = vld [vmem:[#allocation2 + $0x28] sm:$0xff]
        %v582 = vld [vmem:[#allocation2 + $0x30] sm:$0xff]
        %v583 = vld [vmem:[#allocation2 + $0x38] sm:$0xff]
        %v584 = vld [vmem:[#allocation2 + $0x40] sm:$0xff]
        %v585 = vld [vmem:[#allocation2 + $0x48] sm:$0xff]
        %v586 = vld [vmem:[#allocation2 + $0x50] sm:$0xff]
        %v587 = vld [vmem:[#allocation2 + $0x58] sm:$0xff]
        %v588 = vld [vmem:[#allocation2 + $0x60] sm:$0xff]
        %v589 = vld [vmem:[#allocation2 + $0x68] sm:$0xff]
        %v590 = vld [vmem:[#allocation2 + $0x70] sm:$0xff]
        %v591 = vld [vmem:[#allocation2 + $0x78] sm:$0xff]
        %592 = vst [vmem:[%s176] sm:$0xff] %v576
        %593 = vst [vmem:[%s176 + $0x8] sm:$0xff] %v577
        %594 = vst [vmem:[%s176 + $0x10] sm:$0xff] %v578
        %595 = vst [vmem:[%s176 + $0x18] sm:$0xff] %v579
        %596 = vst [vmem:[%s176 + $0x20] sm:$0xff] %v580
        %597 = vst [vmem:[%s176 + $0x28] sm:$0xff] %v581
        %598 = vst [vmem:[%s176 + $0x30] sm:$0xff] %v582
        %599 = vst [vmem:[%s176 + $0x38] sm:$0xff] %v583
        %600 = vst [vmem:[%s176 + $0x40] sm:$0xff] %v584
        %601 = vst [vmem:[%s176 + $0x48] sm:$0xff] %v585
        %602 = vst [vmem:[%s176 + $0x50] sm:$0xff] %v586
        %603 = vst [vmem:[%s176 + $0x58] sm:$0xff] %v587
        %604 = vst [vmem:[%s176 + $0x60] sm:$0xff] %v588
        %605 = vst [vmem:[%s176 + $0x68] sm:$0xff] %v589
        %606 = vst [vmem:[%s176 + $0x70] sm:$0xff] %v590
        %607 = vst [vmem:[%s176 + $0x78] sm:$0xff] %v591
      $region36: #{gcn_model_ae_forward.8} parent=27 // pred_fallthru
        _
      %s608 = smul.u32 16, %s17
      %p609 = scmp.lt.s32.totalorder %s608, 31
      %s610 = scalar_select %p609, %s608, 31
      %s611 = smul.addr %s610, 8
      %s612 = scalar_lea.vmem %s2, %s611
      // Predicated region
      $region37: #{gcn_model_ae_forward.8} parent=27 // pred_check
        %p613 = pneg %p92
      $region38: #{gcn_model_ae_forward.8} parent=27 // pred_check_branch
        %615 = sbr.rel (%p613) target = $region40
      $region39: #{gcn_model_ae_forward.8} parent=27 // pred_region
        %s616 = smul.u32 16, %s17
      $region40: #{gcn_model_ae_forward.8} parent=27 // pred_fallthru
        _
    $region28: #{gcn_model_ae_forward.8} parent=5 // pred_fallthru
      _
    %p617 = scmp.le.s32.totalorder 2, %s8
    // Predicated region
    $region41: #{gcn_model_ae_forward.8} parent=5 // pred_check
      %p618 = pneg %p617
    $region42: #{gcn_model_ae_forward.8} parent=5 // pred_check_branch
      %620 = sbr.rel (%p618) target = $region44
    $region43: #{gcn_model_ae_forward.8} parent=5 // pred_region
      %s621 = ssub.s32 %s8, 2
      // Predicated region
      $region45: #{gcn_model_ae_forward.8} parent=43 // pred_check
        %p622 = pneg %p98
      $region46: #{gcn_model_ae_forward.8} parent=43 // pred_check_branch
        %624 = sbr.rel (%p622) target = $region48
      $region47: #{gcn_model_ae_forward.8} parent=43 // pred_region
        %s625 = smul.u32 16, %s19
        %p626 = scmp.lt.s32.totalorder %s625, 31
        %s627 = scalar_select %p626, %s625, 31
        %s628 = smul.addr %s627, 8
        %s629 = scalar_lea.vmem %s2, %s628
      $region48: #{gcn_model_ae_forward.8} parent=43 // pred_fallthru
        _
    $region44: #{gcn_model_ae_forward.8} parent=5 // pred_fallthru
      _
  $region6: #{gcn_model_ae_forward.8} parent=0 // loop_footer
    %s12 = sadd.s32 1, %s8
  $region7: #{gcn_model_ae_forward.8} parent=0 // loop_footer_branch
    %7 = sbr.rel target = $region3
  $region8: #{gcn_model_ae_forward.8} parent=0 // loop_exit
    _

// kernel: gcn_model_ae_forward.6
$region0: #{gcn_model_ae_forward.6}
  #allocation0 [shape = 'u32[]', space=smem, size = 0x4, offset = 0x4, fixed_abs, tag = 'smem constant byte address 0x4 - core index']
  #allocation1 [shape = 'u32[144,128]{1,0:T(1,128)}', space=vmem, size = 0x12000, scoped, tag = 'internal scratch']
  #allocation2 [shape = 'f32[128,128]{1,0:T(8,128)}', space=vmem, size = 0x10000, scoped, tag = 'scratch operand']
  %s0 = inlined_call_operand.vmem [shape: bf16[256,256], index: 0, kind: input, shape index: {}]
  %s1 = inlined_call_operand.vmem [shape: bf16[256,128], index: 1, kind: input, shape index: {}]
  %s2 = inlined_call_operand.vmem [shape: bf16[256,128], index: 2, kind: output, shape index: {}]
  %s3 = sld [smem:[#allocation0]]
  $region49: #{gcn_model_ae_forward.6} parent=0
    _
  %s5 = ssub.s32 1, %s3
  %s6 = scalar_select 0, %s5, %s3
  loop: start=0, step=1, limit=4
  $region2: #{gcn_model_ae_forward.6} parent=0 // loop_pre_header
    _
  $region3: #{gcn_model_ae_forward.6} parent=0 // loop_header
    %s8 = sphi 0, %s12
    %p9 = scmp.ge.s32.totalorder %s8, 4
    %s15 = sphi 0, %s27
    %s16 = sphi 0, %s23
    %s17 = sphi 0, %s15
    %s18 = sphi 0, %s16
    %s19 = sphi 0, %s17
    %s20 = sphi 0, %s18
    %s32 = sphi 0, %s34
    %s35 = sphi 0, %s32
    %s36 = sphi 0, %s35
    %s52 = sphi 0, %s36
    %s56 = sphi 0, %s56
    %s58 = sphi 0, %s56
    %s59 = sphi 0, %s58
    %s73 = sphi 0, %s59
    %s79 = sphi 0, %s81
    %s82 = sphi 0, %s79
    %s83 = sphi 0, %s82
    %s99 = sphi 0, %s83
  $region4: #{gcn_model_ae_forward.6} parent=0 // loop_header_branch
    %11 = sbr.rel (%p9) target = $region8
  $region5: #{gcn_model_ae_forward.6} parent=0 // loop_body
    %s13 = ssub.s32 %s8, 1
    %s14 = ssub.s32 %s8, 2
    %s21 = sadd.s32 1, %s16
    %p22 = scmp.ge.s32.totalorder %s21, 1
    %s23 = scalar_select %p22, 0, %s21
    %s24 = sadd.s32 1, %s15
    %s25 = scalar_select %p22, %s24, %s15
    %p26 = scmp.ge.s32.totalorder %s25, 2
    %s27 = scalar_select %p26, 0, %s25
    %s28 = ssub.s32 %s15, %s27
    %s29 = ssub.s32 %s16, %s23
    %s30 = sor.u32 %s28, %s29
    %p31 = scmp.eq.s32.totalorder %s30, 0
    %s33 = sadd.s32 %s32, 1
    %s34 = scalar_select %p31, %s32, %s33
    %p37 = pneg %p31
    %p38 = scmp.eq.s32.totalorder %s8, 1
    %p39 = por %p37, %p38
    %p40 = scmp.ne.s32.totalorder %s32, %s35
    %p41 = scmp.eq.s32.totalorder %s8, 0
    %p42 = por %p40, %p41
    %p43 = scmp.ne.s32.totalorder %s32, %s35
    %p44 = scmp.eq.s32.totalorder %s13, 1
    %p45 = por %p43, %p44
    %p46 = scmp.ne.s32.totalorder %s35, %s36
    %p47 = scmp.eq.s32.totalorder %s13, 0
    %p48 = por %p46, %p47
    %p49 = scmp.ne.s32.totalorder %s35, %s36
    %p50 = scmp.eq.s32.totalorder %s14, 1
    %p51 = por %p49, %p50
    %p53 = scmp.ne.s32.totalorder %s36, %s52
    %p54 = scmp.eq.s32.totalorder %s14, 0
    %p55 = por %p53, %p54
    %s57 = sadd.s32 %s56, 1
    %p60 = scmp.eq.s32.totalorder %s8, 1
    %p61 = scmp.ne.s32.totalorder %s56, %s58
    %p62 = scmp.eq.s32.totalorder %s8, 0
    %p63 = por %p61, %p62
    %p64 = scmp.ne.s32.totalorder %s56, %s58
    %p65 = scmp.eq.s32.totalorder %s13, 1
    %p66 = por %p64, %p65
    %p67 = scmp.ne.s32.totalorder %s58, %s59
    %p68 = scmp.eq.s32.totalorder %s13, 0
    %p69 = por %p67, %p68
    %p70 = scmp.ne.s32.totalorder %s58, %s59
    %p71 = scmp.eq.s32.totalorder %s14, 1
    %p72 = por %p70, %p71
    %p74 = scmp.ne.s32.totalorder %s59, %s73
    %p75 = scmp.eq.s32.totalorder %s14, 0
    %p76 = por %p74, %p75
    %s77 = ssub.s32 %s15, %s27
    %p78 = scmp.eq.s32.totalorder %s77, 0
    %s80 = sadd.s32 %s79, 1
    %s81 = scalar_select %p78, %s79, %s80
    %p84 = pneg %p78
    %p85 = scmp.eq.s32.totalorder %s8, 1
    %p86 = por %p84, %p85
    %p87 = scmp.ne.s32.totalorder %s79, %s82
    %p88 = scmp.eq.s32.totalorder %s8, 0
    %p89 = por %p87, %p88
    %p90 = scmp.ne.s32.totalorder %s79, %s82
    %p91 = scmp.eq.s32.totalorder %s13, 1
    %p92 = por %p90, %p91
    %p93 = scmp.ne.s32.totalorder %s82, %s83
    %p94 = scmp.eq.s32.totalorder %s13, 0
    %p95 = por %p93, %p94
    %p96 = scmp.ne.s32.totalorder %s82, %s83
    %p97 = scmp.eq.s32.totalorder %s14, 1
    %p98 = por %p96, %p97
    %p100 = scmp.ne.s32.totalorder %s83, %s99
    %p101 = scmp.eq.s32.totalorder %s14, 0
    %p102 = por %p100, %p101
    %p103 = scmp.le.s32.totalorder 1, %s8
    %p104 = scmp.lt.s32.totalorder %s8, 3
    %p105 = pnand %p103, %p104
    %p106 = pneg %p105
    // Predicated region
    $region9: #{gcn_model_ae_forward.6} parent=5 // pred_check
      _
    $region10: #{gcn_model_ae_forward.6} parent=5 // pred_check_branch
      %108 = sbr.rel (%p105) target = $region12
    $region11: #{gcn_model_ae_forward.6} parent=5 // pred_region
      %s109 = ssub.s32 %s8, 1
      // Predicated region
      $region13: #{gcn_model_ae_forward.6} parent=11 // pred_check
        %p110 = pneg %p69
      $region14: #{gcn_model_ae_forward.6} parent=11 // pred_check_branch
        %112 = sbr.rel (%p110) target = $region16
      $region15: #{gcn_model_ae_forward.6} parent=11 // pred_region
        _
      $region16: #{gcn_model_ae_forward.6} parent=11 // pred_fallthru
        _
    $region12: #{gcn_model_ae_forward.6} parent=5 // pred_fallthru
      _
    %p113 = scmp.lt.s32.totalorder %s8, 2
    // Predicated region
    $region17: #{gcn_model_ae_forward.6} parent=5 // pred_check
      %p114 = pneg %p113
    $region18: #{gcn_model_ae_forward.6} parent=5 // pred_check_branch
      %116 = sbr.rel (%p114) target = $region20
    $region19: #{gcn_model_ae_forward.6} parent=5 // pred_region
      // Predicated region
      $region21: #{gcn_model_ae_forward.6} parent=19 // pred_check
        %p117 = pneg %p42
      $region22: #{gcn_model_ae_forward.6} parent=19 // pred_check_branch
        %119 = sbr.rel (%p117) target = $region24
      $region23: #{gcn_model_ae_forward.6} parent=19 // pred_region
        %s120 = smul.u32 16, %s15
        %s121 = smul.u32 2, %s16
        %p122 = scmp.lt.s32.totalorder %s120, 31
        %s123 = scalar_select %p122, %s120, 31
        %p124 = scmp.lt.s32.totalorder %s121, 1
        %s125 = scalar_select %p124, %s121, 1
        %s126 = smul.addr %s123, 2
        %s127 = sadd.s32 %s125, %s126
        %s128 = smul.addr %s127, 4
        %s129 = scalar_lea.vmem %s0, %s128
        %s130 = smul.u32 16, %s15
        %s131 = smul.u32 2, %s16
      $region24: #{gcn_model_ae_forward.6} parent=19 // pred_fallthru
        _
    $region20: #{gcn_model_ae_forward.6} parent=5 // pred_fallthru
      _
    %p132 = scmp.le.s32.totalorder 1, %s8
    %p133 = scmp.lt.s32.totalorder %s8, 3
    %p134 = pnand %p132, %p133
    %p135 = pneg %p134
    // Predicated region
    $region25: #{gcn_model_ae_forward.6} parent=5 // pred_check
      _
    $region26: #{gcn_model_ae_forward.6} parent=5 // pred_check_branch
      %137 = sbr.rel (%p134) target = $region28
    $region27: #{gcn_model_ae_forward.6} parent=5 // pred_region
      %s138 = ssub.s32 %s8, 1
      %s139 = smul.u32 16, %s17
      %s140 = smul.u32 2, %s18
      %p141 = scmp.lt.s32.totalorder %s139, 31
      %s142 = scalar_select %p141, %s139, 31
      %p143 = scmp.lt.s32.totalorder %s140, 1
      %s144 = scalar_select %p143, %s140, 1
      %s145 = smul.addr %s142, 2
      %s146 = sadd.s32 %s144, %s145
      %s147 = smul.addr %s146, 4
      %s148 = scalar_lea.vmem %s0, %s147
      %p149 = pneg %p48
      %p150 = pneg %p45
      %p151 = pneg %p69
      %p152 = pneg %p66
      %p153 = pneg %p95
      %p154 = pneg %p92
      %s155 = smul.u32 16, %s17
      %p156 = scmp.lt.s32.totalorder %s155, 31
      %s157 = scalar_select %p156, %s155, 31
      %s158 = smul.addr %s157, 4
      %s159 = scalar_lea.vmem %s2, %s158
      %s160 = smul.u32 16, %s17
      %s161 = smul.u32 2, %s18
      %p162 = scmp.lt.s32.totalorder %s160, 31
      %s163 = scalar_select %p162, %s160, 31
      %p164 = scmp.lt.s32.totalorder %s161, 1
      %s165 = scalar_select %p164, %s161, 1
      %s166 = smul.addr %s163, 2
      %s167 = sadd.s32 %s165, %s166
      %s168 = smul.addr %s167, 4
      %s169 = scalar_lea.vmem %s0, %s168
      %s170 = smul.u32 16, %s17
      %s171 = smul.u32 2, %s18
      %s172 = smul.u32 16, %s17
      %p173 = scmp.lt.s32.totalorder %s172, 31
      %s174 = scalar_select %p173, %s172, 31
      %s175 = smul.addr %s174, 4
      %s176 = scalar_lea.vmem %s2, %s175
      %s177 = smul.u32 16, %s17
      %p179 = scmp.eq.s32.totalorder %s18, 0
      // Predicated region
      $region29: #{gcn_model_ae_forward.6} parent=27 // pred_check
        %p180 = pneg %p179
      $region30: #{gcn_model_ae_forward.6} parent=27 // pred_check_branch
        %182 = sbr.rel (%p180) target = $region32
      $region31: #{gcn_model_ae_forward.6} parent=27 // pred_region
        %183 = vst [vmem:[#allocation2] sm:$0xff] 0.0
        %184 = vst [vmem:[#allocation2 + $0x8] sm:$0xff] 0.0
        %185 = vst [vmem:[#allocation2 + $0x10] sm:$0xff] 0.0
        %186 = vst [vmem:[#allocation2 + $0x18] sm:$0xff] 0.0
        %187 = vst [vmem:[#allocation2 + $0x20] sm:$0xff] 0.0
        %188 = vst [vmem:[#allocation2 + $0x28] sm:$0xff] 0.0
        %189 = vst [vmem:[#allocation2 + $0x30] sm:$0xff] 0.0
        %190 = vst [vmem:[#allocation2 + $0x38] sm:$0xff] 0.0
        %191 = vst [vmem:[#allocation2 + $0x40] sm:$0xff] 0.0
        %192 = vst [vmem:[#allocation2 + $0x48] sm:$0xff] 0.0
        %193 = vst [vmem:[#allocation2 + $0x50] sm:$0xff] 0.0
        %194 = vst [vmem:[#allocation2 + $0x58] sm:$0xff] 0.0
        %195 = vst [vmem:[#allocation2 + $0x60] sm:$0xff] 0.0
        %196 = vst [vmem:[#allocation2 + $0x68] sm:$0xff] 0.0
        %197 = vst [vmem:[#allocation2 + $0x70] sm:$0xff] 0.0
        %198 = vst [vmem:[#allocation2 + $0x78] sm:$0xff] 0.0
      $region32: #{gcn_model_ae_forward.6} parent=27 // pred_fallthru
        _
      %s199 = smul.u32 %s18, 256
      %v200 = vld [vmem:[%s169] sm:$0xff]
      %v201 = vld [vmem:[%s169 + $0x8] sm:$0xff]
      %v202 = vld [vmem:[%s169 + $0x10] sm:$0xff]
      %v203 = vld [vmem:[%s169 + $0x18] sm:$0xff]
      %v204 = vld [vmem:[%s169 + $0x20] sm:$0xff]
      %v205 = vld [vmem:[%s169 + $0x28] sm:$0xff]
      %v206 = vld [vmem:[%s169 + $0x30] sm:$0xff]
      %v207 = vld [vmem:[%s169 + $0x38] sm:$0xff]
      %v208 = vld [vmem:[%s169 + $0x40] sm:$0xff]
      %v209 = vld [vmem:[%s169 + $0x48] sm:$0xff]
      %v210 = vld [vmem:[%s169 + $0x50] sm:$0xff]
      %v211 = vld [vmem:[%s169 + $0x58] sm:$0xff]
      %v212 = vld [vmem:[%s169 + $0x60] sm:$0xff]
      %v213 = vld [vmem:[%s169 + $0x68] sm:$0xff]
      %v214 = vld [vmem:[%s169 + $0x70] sm:$0xff]
      %v215 = vld [vmem:[%s169 + $0x78] sm:$0xff]
      %v216 = vld [vmem:[#allocation2] sm:$0xff]
      %v217 = vld [vmem:[#allocation2 + $0x8] sm:$0xff]
      %v218 = vld [vmem:[#allocation2 + $0x10] sm:$0xff]
      %v219 = vld [vmem:[#allocation2 + $0x18] sm:$0xff]
      %v220 = vld [vmem:[#allocation2 + $0x20] sm:$0xff]
      %v221 = vld [vmem:[#allocation2 + $0x28] sm:$0xff]
      %v222 = vld [vmem:[#allocation2 + $0x30] sm:$0xff]
      %v223 = vld [vmem:[#allocation2 + $0x38] sm:$0xff]
      %v224 = vld [vmem:[#allocation2 + $0x40] sm:$0xff]
      %v225 = vld [vmem:[#allocation2 + $0x48] sm:$0xff]
      %v226 = vld [vmem:[#allocation2 + $0x50] sm:$0xff]
      %v227 = vld [vmem:[#allocation2 + $0x58] sm:$0xff]
      %v228 = vld [vmem:[#allocation2 + $0x60] sm:$0xff]
      %v229 = vld [vmem:[#allocation2 + $0x68] sm:$0xff]
      %v230 = vld [vmem:[#allocation2 + $0x70] sm:$0xff]
      %v231 = vld [vmem:[#allocation2 + $0x78] sm:$0xff]
      %s232 = sshra.s32 %s199, 3
      %s233 = sand.u32 %s199, 7
      %s234 = smul.addr %s232, 4
      %s235 = scalar_lea.vmem %s1, %s234
      %v236 = vld [vmem:[%s235] sm:$0xf]
      %v237 = vld [vmem:[%s235 + $0x4] sm:$0xf]
      %v238 = vld [vmem:[%s235 + $0x8] sm:$0xf]
      %v239 = vld [vmem:[%s235 + $0xc] sm:$0xf]
      %v240 = vld [vmem:[%s235 + $0x10] sm:$0xf]
      %v241 = vld [vmem:[%s235 + $0x14] sm:$0xf]
      %v242 = vld [vmem:[%s235 + $0x18] sm:$0xf]
      %v243 = vld [vmem:[%s235 + $0x1c] sm:$0xf]
      %v244 = vld [vmem:[%s235 + $0x20] sm:$0xf]
      %v245 = vld [vmem:[%s235 + $0x24] sm:$0xf]
      %v246 = vld [vmem:[%s235 + $0x28] sm:$0xf]
      %v247 = vld [vmem:[%s235 + $0x2c] sm:$0xf]
      %v248 = vld [vmem:[%s235 + $0x30] sm:$0xf]
      %v249 = vld [vmem:[%s235 + $0x34] sm:$0xf]
      %v250 = vld [vmem:[%s235 + $0x38] sm:$0xf]
      %v251 = vld [vmem:[%s235 + $0x3c] sm:$0xf]
      %v252 = vld [vmem:[%s235 + $0x40] sm:$0xf]
      %v253 = vld [vmem:[%s235 + $0x44] sm:$0xf]
      %v254 = vld [vmem:[%s235 + $0x48] sm:$0xf]
      %v255 = vld [vmem:[%s235 + $0x4c] sm:$0xf]
      %v256 = vld [vmem:[%s235 + $0x50] sm:$0xf]
      %v257 = vld [vmem:[%s235 + $0x54] sm:$0xf]
      %v258 = vld [vmem:[%s235 + $0x58] sm:$0xf]
      %v259 = vld [vmem:[%s235 + $0x5c] sm:$0xf]
      %v260 = vld [vmem:[%s235 + $0x60] sm:$0xf]
      %v261 = vld [vmem:[%s235 + $0x64] sm:$0xf]
      %v262 = vld [vmem:[%s235 + $0x68] sm:$0xf]
      %v263 = vld [vmem:[%s235 + $0x6c] sm:$0xf]
      %v264 = vld [vmem:[%s235 + $0x70] sm:$0xf]
      %v265 = vld [vmem:[%s235 + $0x74] sm:$0xf]
      %v266 = vld [vmem:[%s235 + $0x78] sm:$0xf]
      %v267 = vld [vmem:[%s235 + $0x7c] sm:$0xf]
      %v284 = vunpack.c.l.b16 %v200
      %v285 = vunpack.c.h.b16 %v200
      %v286 = vunpack.c.l.b16 %v201
      %v287 = vunpack.c.h.b16 %v201
      %v288 = vunpack.c.l.b16 %v202
      %v289 = vunpack.c.h.b16 %v202
      %v290 = vunpack.c.l.b16 %v203
      %v291 = vunpack.c.h.b16 %v203
      %v292 = vunpack.c.l.b16 %v204
      %v293 = vunpack.c.h.b16 %v204
      %v294 = vunpack.c.l.b16 %v205
      %v295 = vunpack.c.h.b16 %v205
      %v296 = vunpack.c.l.b16 %v206
      %v297 = vunpack.c.h.b16 %v206
      %v298 = vunpack.c.l.b16 %v207
      %v299 = vunpack.c.h.b16 %v207
      %v300 = vunpack.c.l.b16 %v208
      %v301 = vunpack.c.h.b16 %v208
      %v302 = vunpack.c.l.b16 %v209
      %v303 = vunpack.c.h.b16 %v209
      %v304 = vunpack.c.l.b16 %v210
      %v305 = vunpack.c.h.b16 %v210
      %v306 = vunpack.c.l.b16 %v211
      %v307 = vunpack.c.h.b16 %v211
      %v308 = vunpack.c.l.b16 %v212
      %v309 = vunpack.c.h.b16 %v212
      %v310 = vunpack.c.l.b16 %v213
      %v311 = vunpack.c.h.b16 %v213
      %v312 = vunpack.c.l.b16 %v214
      %v313 = vunpack.c.h.b16 %v214
      %v314 = vunpack.c.l.b16 %v215
      %v315 = vunpack.c.h.b16 %v215
      %v316 = vpack.c.b16 %v286, %v284
      %v317 = vpack.c.b16 %v287, %v285
      %v318 = vpack.c.b16 %v290, %v288
      %v319 = vpack.c.b16 %v291, %v289
      %v320 = vpack.c.b16 %v294, %v292
      %v321 = vpack.c.b16 %v295, %v293
      %v322 = vpack.c.b16 %v298, %v296
      %v323 = vpack.c.b16 %v299, %v297
      %v324 = vpack.c.b16 %v302, %v300
      %v325 = vpack.c.b16 %v303, %v301
      %v326 = vpack.c.b16 %v306, %v304
      %v327 = vpack.c.b16 %v307, %v305
      %v328 = vpack.c.b16 %v310, %v308
      %v329 = vpack.c.b16 %v311, %v309
      %v330 = vpack.c.b16 %v314, %v312
      %v331 = vpack.c.b16 %v315, %v313
      %v380 = vunpack.c.l.b16 %v236
      %v381 = vunpack.c.l.b16 %v237
      %v382 = vunpack.c.l.b16 %v238
      %v383 = vunpack.c.l.b16 %v239
      %v384 = vunpack.c.l.b16 %v240
      %v385 = vunpack.c.l.b16 %v241
      %v386 = vunpack.c.l.b16 %v242
      %v387 = vunpack.c.l.b16 %v243
      %v388 = vunpack.c.l.b16 %v244
      %v389 = vunpack.c.l.b16 %v245
      %v390 = vunpack.c.l.b16 %v246
      %v391 = vunpack.c.l.b16 %v247
      %v392 = vunpack.c.l.b16 %v248
      %v393 = vunpack.c.l.b16 %v249
      %v394 = vunpack.c.l.b16 %v250
      %v395 = vunpack.c.l.b16 %v251
      %v396 = vunpack.c.l.b16 %v252
      %v397 = vunpack.c.l.b16 %v253
      %v398 = vunpack.c.l.b16 %v254
      %v399 = vunpack.c.l.b16 %v255
      %v400 = vunpack.c.l.b16 %v256
      %v401 = vunpack.c.l.b16 %v257
      %v402 = vunpack.c.l.b16 %v258
      %v403 = vunpack.c.l.b16 %v259
      %v404 = vunpack.c.l.b16 %v260
      %v405 = vunpack.c.l.b16 %v261
      %v406 = vunpack.c.l.b16 %v262
      %v407 = vunpack.c.l.b16 %v263
      %v408 = vunpack.c.l.b16 %v264
      %v409 = vunpack.c.l.b16 %v265
      %v410 = vunpack.c.l.b16 %v266
      %v411 = vunpack.c.l.b16 %v267
      %v412 = vpack.c.b16 %v381, %v380
      %v413 = vpack.c.b16 %v383, %v382
      %v414 = vpack.c.b16 %v385, %v384
      %v415 = vpack.c.b16 %v387, %v386
      %v416 = vpack.c.b16 %v389, %v388
      %v417 = vpack.c.b16 %v391, %v390
      %v418 = vpack.c.b16 %v393, %v392
      %v419 = vpack.c.b16 %v395, %v394
      %v420 = vpack.c.b16 %v397, %v396
      %v421 = vpack.c.b16 %v399, %v398
      %v422 = vpack.c.b16 %v401, %v400
      %v423 = vpack.c.b16 %v403, %v402
      %v424 = vpack.c.b16 %v405, %v404
      %v425 = vpack.c.b16 %v407, %v406
      %v426 = vpack.c.b16 %v409, %v408
      %v427 = vpack.c.b16 %v411, %v410
      %444 = vmatprep.subr.bf16.mxu0 0
      %445 = vmatpush1.bf16.msra.mxu0 %v412
      %446 = vmatprep.subr.bf16.mxu0 0
      %447 = vmatpush1.bf16.msra.mxu0 %v413
      %448 = vmatprep.subr.bf16.mxu0 0
      %449 = vmatpush1.bf16.msra.mxu0 %v414
      %450 = vmatprep.subr.bf16.mxu0 0
      %451 = vmatpush1.bf16.msra.mxu0 %v415
      %452 = vmatprep.subr.bf16.mxu0 0
      %453 = vmatpush1.bf16.msra.mxu0 %v416
      %454 = vmatprep.subr.bf16.mxu0 0
      %455 = vmatpush1.bf16.msra.mxu0 %v417
      %456 = vmatprep.subr.bf16.mxu0 0
      %457 = vmatpush1.bf16.msra.mxu0 %v418
      %458 = vmatprep.subr.bf16.mxu0 0
      %459 = vmatpush1.bf16.msra.mxu0 %v419
      %460 = vmatprep.subr.bf16.mxu0 0
      %461 = vmatpush1.bf16.msra.mxu0 %v420
      %462 = vmatprep.subr.bf16.mxu0 0
      %463 = vmatpush1.bf16.msra.mxu0 %v421
      %464 = vmatprep.subr.bf16.mxu0 0
      %465 = vmatpush1.bf16.msra.mxu0 %v422
      %466 = vmatprep.subr.bf16.mxu0 0
      %467 = vmatpush1.bf16.msra.mxu0 %v423
      %468 = vmatprep.subr.bf16.mxu0 0
      %469 = vmatpush1.bf16.msra.mxu0 %v424
      %470 = vmatprep.subr.bf16.mxu0 0
      %471 = vmatpush1.bf16.msra.mxu0 %v425
      %472 = vmatprep.subr.bf16.mxu0 0
      %473 = vmatpush1.bf16.msra.mxu0 %v426
      %474 = vmatprep.subr.bf16.mxu0 0
      %475 = vmatpush1.bf16.msra.mxu0 %v427
      %476 = vmatprep.mubr.bf16.mxu0 %v317
      %477 = vmatmul.mubr.bf16.gmra.mrb[0].mxu0 %v316
      %v478 = vpop.f32.mrb[0].mxu0
      %v479 = vadd.f32 0.0, %v478
      %v480 = vpop.f32.mrb[0].mxu0
      %v481 = vpop.f32.mrb[0].mxu0
      %v482 = vadd.f32 0.0, %v481
      %v483 = vpop.f32.mrb[0].mxu0
      %484 = vmatprep.mubr.bf16.mxu0 %v319
      %485 = vmatmul.mubr.bf16.gmra.mrb[0].mxu0 %v318
      %v486 = vpop.f32.mrb[0].mxu0
      %v487 = vadd.f32 0.0, %v486
      %v488 = vpop.f32.mrb[0].mxu0
      %v489 = vpop.f32.mrb[0].mxu0
      %v490 = vadd.f32 0.0, %v489
      %v491 = vpop.f32.mrb[0].mxu0
      %492 = vmatprep.mubr.bf16.mxu0 %v321
      %493 = vmatmul.mubr.bf16.gmra.mrb[0].mxu0 %v320
      %v494 = vpop.f32.mrb[0].mxu0
      %v495 = vadd.f32 0.0, %v494
      %v496 = vpop.f32.mrb[0].mxu0
      %v497 = vpop.f32.mrb[0].mxu0
      %v498 = vadd.f32 0.0, %v497
      %v499 = vpop.f32.mrb[0].mxu0
      %500 = vmatprep.mubr.bf16.mxu0 %v323
      %501 = vmatmul.mubr.bf16.gmra.mrb[0].mxu0 %v322
      %v502 = vpop.f32.mrb[0].mxu0
      %v503 = vadd.f32 0.0, %v502
      %v504 = vpop.f32.mrb[0].mxu0
      %v505 = vpop.f32.mrb[0].mxu0
      %v506 = vadd.f32 0.0, %v505
      %v507 = vpop.f32.mrb[0].mxu0
      %508 = vmatprep.mubr.bf16.mxu0 %v325
      %509 = vmatmul.mubr.bf16.gmra.mrb[0].mxu0 %v324
      %v510 = vpop.f32.mrb[0].mxu0
      %v511 = vadd.f32 0.0, %v510
      %v512 = vpop.f32.mrb[0].mxu0
      %v513 = vpop.f32.mrb[0].mxu0
      %v514 = vadd.f32 0.0, %v513
      %v515 = vpop.f32.mrb[0].mxu0
      %516 = vmatprep.mubr.bf16.mxu0 %v327
      %517 = vmatmul.mubr.bf16.gmra.mrb[0].mxu0 %v326
      %v518 = vpop.f32.mrb[0].mxu0
      %v519 = vadd.f32 0.0, %v518
      %v520 = vpop.f32.mrb[0].mxu0
      %v521 = vpop.f32.mrb[0].mxu0
      %v522 = vadd.f32 0.0, %v521
      %v523 = vpop.f32.mrb[0].mxu0
      %524 = vmatprep.mubr.bf16.mxu0 %v329
      %525 = vmatmul.mubr.bf16.gmra.mrb[0].mxu0 %v328
      %v526 = vpop.f32.mrb[0].mxu0
      %v527 = vadd.f32 0.0, %v526
      %v528 = vpop.f32.mrb[0].mxu0
      %v529 = vpop.f32.mrb[0].mxu0
      %v530 = vadd.f32 0.0, %v529
      %v531 = vpop.f32.mrb[0].mxu0
      %532 = vmatprep.mubr.bf16.mxu0 %v331
      %533 = vmatmul.mubr.bf16.gmra.mrb[0].mxu0 %v330
      %v534 = vpop.f32.mrb[0].mxu0
      %v535 = vadd.f32 0.0, %v534
      %v536 = vpop.f32.mrb[0].mxu0
      %v537 = vpop.f32.mrb[0].mxu0
      %v538 = vadd.f32 0.0, %v537
      %v539 = vpop.f32.mrb[0].mxu0
      %540 = vdwg.mxu0
      %v541 = vadd.f32 %v216, %v479
      %v542 = vadd.f32 %v217, %v482
      %v543 = vadd.f32 %v218, %v487
      %v544 = vadd.f32 %v219, %v490
      %v545 = vadd.f32 %v220, %v495
      %v546 = vadd.f32 %v221, %v498
      %v547 = vadd.f32 %v222, %v503
      %v548 = vadd.f32 %v223, %v506
      %v549 = vadd.f32 %v224, %v511
      %v550 = vadd.f32 %v225, %v514
      %v551 = vadd.f32 %v226, %v519
      %v552 = vadd.f32 %v227, %v522
      %v553 = vadd.f32 %v228, %v527
      %v554 = vadd.f32 %v229, %v530
      %v555 = vadd.f32 %v230, %v535
      %v556 = vadd.f32 %v231, %v538
      %557 = vst [vmem:[#allocation2] sm:$0xff] %v541
      %558 = vst [vmem:[#allocation2 + $0x8] sm:$0xff] %v542
      %559 = vst [vmem:[#allocation2 + $0x10] sm:$0xff] %v543
      %560 = vst [vmem:[#allocation2 + $0x18] sm:$0xff] %v544
      %561 = vst [vmem:[#allocation2 + $0x20] sm:$0xff] %v545
      %562 = vst [vmem:[#allocation2 + $0x28] sm:$0xff] %v546
      %563 = vst [vmem:[#allocation2 + $0x30] sm:$0xff] %v547
      %564 = vst [vmem:[#allocation2 + $0x38] sm:$0xff] %v548
      %565 = vst [vmem:[#allocation2 + $0x40] sm:$0xff] %v549
      %566 = vst [vmem:[#allocation2 + $0x48] sm:$0xff] %v550
      %567 = vst [vmem:[#allocation2 + $0x50] sm:$0xff] %v551
      %568 = vst [vmem:[#allocation2 + $0x58] sm:$0xff] %v552
      %569 = vst [vmem:[#allocation2 + $0x60] sm:$0xff] %v553
      %570 = vst [vmem:[#allocation2 + $0x68] sm:$0xff] %v554
      %571 = vst [vmem:[#allocation2 + $0x70] sm:$0xff] %v555
      %572 = vst [vmem:[#allocation2 + $0x78] sm:$0xff] %v556
      // Predicated region
      $region33: #{gcn_model_ae_forward.6} parent=27 // pred_check
        %p573 = pneg %p179
      $region34: #{gcn_model_ae_forward.6} parent=27 // pred_check_branch
        %575 = sbr.rel (%p573) target = $region36
      $region35: #{gcn_model_ae_forward.6} parent=27 // pred_region
        %v576 = vld [vmem:[#allocation2] sm:$0xff]
        %v577 = vld [vmem:[#allocation2 + $0x8] sm:$0xff]
        %v578 = vld [vmem:[#allocation2 + $0x10] sm:$0xff]
        %v579 = vld [vmem:[#allocation2 + $0x18] sm:$0xff]
        %v580 = vld [vmem:[#allocation2 + $0x20] sm:$0xff]
        %v581 = vld [vmem:[#allocation2 + $0x28] sm:$0xff]
        %v582 = vld [vmem:[#allocation2 + $0x30] sm:$0xff]
        %v583 = vld [vmem:[#allocation2 + $0x38] sm:$0xff]
        %v584 = vld [vmem:[#allocation2 + $0x40] sm:$0xff]
        %v585 = vld [vmem:[#allocation2 + $0x48] sm:$0xff]
        %v586 = vld [vmem:[#allocation2 + $0x50] sm:$0xff]
        %v587 = vld [vmem:[#allocation2 + $0x58] sm:$0xff]
        %v588 = vld [vmem:[#allocation2 + $0x60] sm:$0xff]
        %v589 = vld [vmem:[#allocation2 + $0x68] sm:$0xff]
        %v590 = vld [vmem:[#allocation2 + $0x70] sm:$0xff]
        %v591 = vld [vmem:[#allocation2 + $0x78] sm:$0xff]
        %v592 = vmax.f32 %v576, 0.0
        %v593 = vmax.f32 %v577, 0.0
        %v594 = vmax.f32 %v578, 0.0
        %v595 = vmax.f32 %v579, 0.0
        %v596 = vmax.f32 %v580, 0.0
        %v597 = vmax.f32 %v581, 0.0
        %v598 = vmax.f32 %v582, 0.0
        %v599 = vmax.f32 %v583, 0.0
        %v600 = vmax.f32 %v584, 0.0
        %v601 = vmax.f32 %v585, 0.0
        %v602 = vmax.f32 %v586, 0.0
        %v603 = vmax.f32 %v587, 0.0
        %v604 = vmax.f32 %v588, 0.0
        %v605 = vmax.f32 %v589, 0.0
        %v606 = vmax.f32 %v590, 0.0
        %v607 = vmax.f32 %v591, 0.0
        %v608 = vpack.c.bf16 %v593, %v592
        %v609 = vpack.c.bf16 %v595, %v594
        %v610 = vpack.c.bf16 %v597, %v596
        %v611 = vpack.c.bf16 %v599, %v598
        %v612 = vpack.c.bf16 %v601, %v600
        %v613 = vpack.c.bf16 %v603, %v602
        %v614 = vpack.c.bf16 %v605, %v604
        %v615 = vpack.c.bf16 %v607, %v606
        %v624 = vunpack.c.l.b16 %v608
        %v625 = vunpack.c.h.b16 %v608
        %v626 = vunpack.c.l.b16 %v609
        %v627 = vunpack.c.h.b16 %v609
        %v628 = vunpack.c.l.b16 %v610
        %v629 = vunpack.c.h.b16 %v610
        %v630 = vunpack.c.l.b16 %v611
        %v631 = vunpack.c.h.b16 %v611
        %v632 = vunpack.c.l.b16 %v612
        %v633 = vunpack.c.h.b16 %v612
        %v634 = vunpack.c.l.b16 %v613
        %v635 = vunpack.c.h.b16 %v613
        %v636 = vunpack.c.l.b16 %v614
        %v637 = vunpack.c.h.b16 %v614
        %v638 = vunpack.c.l.b16 %v615
        %v639 = vunpack.c.h.b16 %v615
        %v640 = vpack.c.b16 %v624, %v624
        %v641 = vpack.c.b16 %v625, %v625
        %v642 = vpack.c.b16 %v626, %v626
        %v643 = vpack.c.b16 %v627, %v627
        %v644 = vpack.c.b16 %v628, %v628
        %v645 = vpack.c.b16 %v629, %v629
        %v646 = vpack.c.b16 %v630, %v630
        %v647 = vpack.c.b16 %v631, %v631
        %v648 = vpack.c.b16 %v632, %v632
        %v649 = vpack.c.b16 %v633, %v633
        %v650 = vpack.c.b16 %v634, %v634
        %v651 = vpack.c.b16 %v635, %v635
        %v652 = vpack.c.b16 %v636, %v636
        %v653 = vpack.c.b16 %v637, %v637
        %v654 = vpack.c.b16 %v638, %v638
        %v655 = vpack.c.b16 %v639, %v639
        %672 = vst [vmem:[%s176] sm:$0xf] %v640
        %673 = vst [vmem:[%s176 + $0x4] sm:$0xf] %v641
        %674 = vst [vmem:[%s176 + $0x8] sm:$0xf] %v642
        %675 = vst [vmem:[%s176 + $0xc] sm:$0xf] %v643
        %676 = vst [vmem:[%s176 + $0x10] sm:$0xf] %v644
        %677 = vst [vmem:[%s176 + $0x14] sm:$0xf] %v645
        %678 = vst [vmem:[%s176 + $0x18] sm:$0xf] %v646
        %679 = vst [vmem:[%s176 + $0x1c] sm:$0xf] %v647
        %680 = vst [vmem:[%s176 + $0x20] sm:$0xf] %v648
        %681 = vst [vmem:[%s176 + $0x24] sm:$0xf] %v649
        %682 = vst [vmem:[%s176 + $0x28] sm:$0xf] %v650
        %683 = vst [vmem:[%s176 + $0x2c] sm:$0xf] %v651
        %684 = vst [vmem:[%s176 + $0x30] sm:$0xf] %v652
        %685 = vst [vmem:[%s176 + $0x34] sm:$0xf] %v653
        %686 = vst [vmem:[%s176 + $0x38] sm:$0xf] %v654
        %687 = vst [vmem:[%s176 + $0x3c] sm:$0xf] %v655
      $region36: #{gcn_model_ae_forward.6} parent=27 // pred_fallthru
        _
      %s688 = smul.u32 16, %s17
      %p689 = scmp.lt.s32.totalorder %s688, 31
      %s690 = scalar_select %p689, %s688, 31
      %s691 = smul.addr %s690, 4
      %s692 = scalar_lea.vmem %s2, %s691
      // Predicated region
      $region37: #{gcn_model_ae_forward.6} parent=27 // pred_check
        %p693 = pneg %p92
      $region38: #{gcn_model_ae_forward.6} parent=27 // pred_check_branch
        %695 = sbr.rel (%p693) target = $region40
      $region39: #{gcn_model_ae_forward.6} parent=27 // pred_region
        %s696 = smul.u32 16, %s17
      $region40: #{gcn_model_ae_forward.6} parent=27 // pred_fallthru
        _
    $region28: #{gcn_model_ae_forward.6} parent=5 // pred_fallthru
      _
    %p697 = scmp.le.s32.totalorder 2, %s8
    // Predicated region
    $region41: #{gcn_model_ae_forward.6} parent=5 // pred_check
      %p698 = pneg %p697
    $region42: #{gcn_model_ae_forward.6} parent=5 // pred_check_branch
      %700 = sbr.rel (%p698) target = $region44
    $region43: #{gcn_model_ae_forward.6} parent=5 // pred_region
      %s701 = ssub.s32 %s8, 2
      // Predicated region
      $region45: #{gcn_model_ae_forward.6} parent=43 // pred_check
        %p702 = pneg %p98
      $region46: #{gcn_model_ae_forward.6} parent=43 // pred_check_branch
        %704 = sbr.rel (%p702) target = $region48
      $region47: #{gcn_model_ae_forward.6} parent=43 // pred_region
        %s705 = smul.u32 16, %s19
        %p706 = scmp.lt.s32.totalorder %s705, 31
        %s707 = scalar_select %p706, %s705, 31
        %s708 = smul.addr %s707, 4
        %s709 = scalar_lea.vmem %s2, %s708
      $region48: #{gcn_model_ae_forward.6} parent=43 // pred_fallthru
        _
    $region44: #{gcn_model_ae_forward.6} parent=5 // pred_fallthru
      _
  $region6: #{gcn_model_ae_forward.6} parent=0 // loop_footer
    %s12 = sadd.s32 1, %s8
  $region7: #{gcn_model_ae_forward.6} parent=0 // loop_footer_branch
    %7 = sbr.rel target = $region3
  $region8: #{gcn_model_ae_forward.6} parent=0 // loop_exit
    _

// kernel: gcn_model_ae_forward.9
$region0: #{gcn_model_ae_forward.9}
  #allocation0 [shape = 'u32[]', space=smem, size = 0x4, offset = 0x4, fixed_abs, tag = 'smem constant byte address 0x4 - core index']
  #allocation1 [shape = 'u32[144,128]{1,0:T(1,128)}', space=vmem, size = 0x12000, scoped, tag = 'internal scratch']
  %s0 = inlined_call_operand.vmem [shape: bf16[256,128], index: 0, kind: input, shape index: {}]
  %s1 = inlined_call_operand.vmem [shape: bf16[128,256], index: 1, kind: input, shape index: {}]
  %s2 = inlined_call_operand.vmem [shape: bf16[256,256], index: 2, kind: output, shape index: {}]
  %s3 = sld [smem:[#allocation0]]
  $region41: #{gcn_model_ae_forward.9} parent=0
    _
  %s5 = ssub.s32 1, %s3
  %s6 = scalar_select 0, %s5, %s3
  loop: start=0, step=1, limit=4
  $region2: #{gcn_model_ae_forward.9} parent=0 // loop_pre_header
    _
  $region3: #{gcn_model_ae_forward.9} parent=0 // loop_header
    %s8 = sphi 0, %s12
    %p9 = scmp.ge.s32.totalorder %s8, 4
    %s15 = sphi 0, %s27
    %s16 = sphi 0, %s23
    %s17 = sphi 0, %s15
    %s18 = sphi 0, %s16
    %s19 = sphi 0, %s17
    %s20 = sphi 0, %s18
    %s30 = sphi 0, %s32
    %s33 = sphi 0, %s30
    %s34 = sphi 0, %s33
    %s50 = sphi 0, %s34
    %s56 = sphi 0, %s58
    %s59 = sphi 0, %s56
    %s60 = sphi 0, %s59
    %s76 = sphi 0, %s60
    %s84 = sphi 0, %s86
    %s87 = sphi 0, %s84
    %s88 = sphi 0, %s87
    %s104 = sphi 0, %s88
  $region4: #{gcn_model_ae_forward.9} parent=0 // loop_header_branch
    %11 = sbr.rel (%p9) target = $region8
  $region5: #{gcn_model_ae_forward.9} parent=0 // loop_body
    %s13 = ssub.s32 %s8, 1
    %s14 = ssub.s32 %s8, 2
    %s21 = sadd.s32 1, %s16
    %p22 = scmp.ge.s32.totalorder %s21, 2
    %s23 = scalar_select %p22, 0, %s21
    %s24 = sadd.s32 1, %s15
    %s25 = scalar_select %p22, %s24, %s15
    %p26 = scmp.ge.s32.totalorder %s25, 1
    %s27 = scalar_select %p26, 0, %s25
    %s28 = ssub.s32 %s16, %s23
    %p29 = scmp.eq.s32.totalorder %s28, 0
    %s31 = sadd.s32 %s30, 1
    %s32 = scalar_select %p29, %s30, %s31
    %p35 = pneg %p29
    %p36 = scmp.eq.s32.totalorder %s8, 1
    %p37 = por %p35, %p36
    %p38 = scmp.ne.s32.totalorder %s30, %s33
    %p39 = scmp.eq.s32.totalorder %s8, 0
    %p40 = por %p38, %p39
    %p41 = scmp.ne.s32.totalorder %s30, %s33
    %p42 = scmp.eq.s32.totalorder %s13, 1
    %p43 = por %p41, %p42
    %p44 = scmp.ne.s32.totalorder %s33, %s34
    %p45 = scmp.eq.s32.totalorder %s13, 0
    %p46 = por %p44, %p45
    %p47 = scmp.ne.s32.totalorder %s33, %s34
    %p48 = scmp.eq.s32.totalorder %s14, 1
    %p49 = por %p47, %p48
    %p51 = scmp.ne.s32.totalorder %s34, %s50
    %p52 = scmp.eq.s32.totalorder %s14, 0
    %p53 = por %p51, %p52
    %s54 = ssub.s32 %s15, %s27
    %p55 = scmp.eq.s32.totalorder %s54, 0
    %s57 = sadd.s32 %s56, 1
    %s58 = scalar_select %p55, %s56, %s57
    %p61 = pneg %p55
    %p62 = scmp.eq.s32.totalorder %s8, 1
    %p63 = por %p61, %p62
    %p64 = scmp.ne.s32.totalorder %s56, %s59
    %p65 = scmp.eq.s32.totalorder %s8, 0
    %p66 = por %p64, %p65
    %p67 = scmp.ne.s32.totalorder %s56, %s59
    %p68 = scmp.eq.s32.totalorder %s13, 1
    %p69 = por %p67, %p68
    %p70 = scmp.ne.s32.totalorder %s59, %s60
    %p71 = scmp.eq.s32.totalorder %s13, 0
    %p72 = por %p70, %p71
    %p73 = scmp.ne.s32.totalorder %s59, %s60
    %p74 = scmp.eq.s32.totalorder %s14, 1
    %p75 = por %p73, %p74
    %p77 = scmp.ne.s32.totalorder %s60, %s76
    %p78 = scmp.eq.s32.totalorder %s14, 0
    %p79 = por %p77, %p78
    %s80 = ssub.s32 %s16, %s23
    %s81 = ssub.s32 %s15, %s27
    %s82 = sor.u32 %s80, %s81
    %p83 = scmp.eq.s32.totalorder %s82, 0
    %s85 = sadd.s32 %s84, 1
    %s86 = scalar_select %p83, %s84, %s85
    %p89 = pneg %p83
    %p90 = scmp.eq.s32.totalorder %s8, 1
    %p91 = por %p89, %p90
    %p92 = scmp.ne.s32.totalorder %s84, %s87
    %p93 = scmp.eq.s32.totalorder %s8, 0
    %p94 = por %p92, %p93
    %p95 = scmp.ne.s32.totalorder %s84, %s87
    %p96 = scmp.eq.s32.totalorder %s13, 1
    %p97 = por %p95, %p96
    %p98 = scmp.ne.s32.totalorder %s87, %s88
    %p99 = scmp.eq.s32.totalorder %s13, 0
    %p100 = por %p98, %p99
    %p101 = scmp.ne.s32.totalorder %s87, %s88
    %p102 = scmp.eq.s32.totalorder %s14, 1
    %p103 = por %p101, %p102
    %p105 = scmp.ne.s32.totalorder %s88, %s104
    %p106 = scmp.eq.s32.totalorder %s14, 0
    %p107 = por %p105, %p106
    %p108 = scmp.le.s32.totalorder 1, %s8
    %p109 = scmp.lt.s32.totalorder %s8, 3
    %p110 = pnand %p108, %p109
    %p111 = pneg %p110
    // Predicated region
    $region9: #{gcn_model_ae_forward.9} parent=5 // pred_check
      _
    $region10: #{gcn_model_ae_forward.9} parent=5 // pred_check_branch
      %113 = sbr.rel (%p110) target = $region12
    $region11: #{gcn_model_ae_forward.9} parent=5 // pred_region
      %s114 = ssub.s32 %s8, 1
      // Predicated region
      $region13: #{gcn_model_ae_forward.9} parent=11 // pred_check
        %p115 = pneg %p72
      $region14: #{gcn_model_ae_forward.9} parent=11 // pred_check_branch
        %117 = sbr.rel (%p115) target = $region16
      $region15: #{gcn_model_ae_forward.9} parent=11 // pred_region
        %s118 = smul.u32 2, %s17
        %p119 = scmp.lt.s32.totalorder %s118, 1
        %s120 = scalar_select %p119, %s118, 1
        %s121 = smul.addr %s120, 4
        %s122 = scalar_lea.vmem %s1, %s121
        %s123 = smul.u32 2, %s17
      $region16: #{gcn_model_ae_forward.9} parent=11 // pred_fallthru
        _
    $region12: #{gcn_model_ae_forward.9} parent=5 // pred_fallthru
      _
    %p124 = scmp.lt.s32.totalorder %s8, 2
    // Predicated region
    $region17: #{gcn_model_ae_forward.9} parent=5 // pred_check
      %p125 = pneg %p124
    $region18: #{gcn_model_ae_forward.9} parent=5 // pred_check_branch
      %127 = sbr.rel (%p125) target = $region20
    $region19: #{gcn_model_ae_forward.9} parent=5 // pred_region
      // Predicated region
      $region21: #{gcn_model_ae_forward.9} parent=19 // pred_check
        %p128 = pneg %p40
      $region22: #{gcn_model_ae_forward.9} parent=19 // pred_check_branch
        %130 = sbr.rel (%p128) target = $region24
      $region23: #{gcn_model_ae_forward.9} parent=19 // pred_region
        %s131 = smul.u32 16, %s16
        %p132 = scmp.lt.s32.totalorder %s131, 31
        %s133 = scalar_select %p132, %s131, 31
        %s134 = smul.addr %s133, 4
        %s135 = scalar_lea.vmem %s0, %s134
        %s136 = smul.u32 16, %s16
      $region24: #{gcn_model_ae_forward.9} parent=19 // pred_fallthru
        _
    $region20: #{gcn_model_ae_forward.9} parent=5 // pred_fallthru
      _
    %p137 = scmp.le.s32.totalorder 1, %s8
    %p138 = scmp.lt.s32.totalorder %s8, 3
    %p139 = pnand %p137, %p138
    %p140 = pneg %p139
    // Predicated region
    $region25: #{gcn_model_ae_forward.9} parent=5 // pred_check
      _
    $region26: #{gcn_model_ae_forward.9} parent=5 // pred_check_branch
      %142 = sbr.rel (%p139) target = $region28
    $region27: #{gcn_model_ae_forward.9} parent=5 // pred_region
      %s143 = ssub.s32 %s8, 1
      %s144 = smul.u32 16, %s18
      %p145 = scmp.lt.s32.totalorder %s144, 31
      %s146 = scalar_select %p145, %s144, 31
      %s147 = smul.addr %s146, 4
      %s148 = scalar_lea.vmem %s0, %s147
      %p149 = pneg %p46
      %p150 = pneg %p43
      %s151 = smul.u32 2, %s17
      %p152 = scmp.lt.s32.totalorder %s151, 1
      %s153 = scalar_select %p152, %s151, 1
      %s154 = smul.addr %s153, 4
      %s155 = scalar_lea.vmem %s1, %s154
      %p156 = pneg %p72
      %p157 = pneg %p69
      %p158 = pneg %p100
      %p159 = pneg %p97
      %s160 = smul.u32 16, %s18
      %s161 = smul.u32 2, %s17
      %p162 = scmp.lt.s32.totalorder %s160, 31
      %s163 = scalar_select %p162, %s160, 31
      %p164 = scmp.lt.s32.totalorder %s161, 1
      %s165 = scalar_select %p164, %s161, 1
      %s166 = smul.addr %s163, 2
      %s167 = sadd.s32 %s165, %s166
      %s168 = smul.addr %s167, 4
      %s169 = scalar_lea.vmem %s2, %s168
      %s170 = smul.u32 16, %s18
      %p171 = scmp.lt.s32.totalorder %s170, 31
      %s172 = scalar_select %p171, %s170, 31
      %s173 = smul.addr %s172, 4
      %s174 = scalar_lea.vmem %s0, %s173
      %s175 = smul.u32 16, %s18
      %s176 = smul.u32 2, %s17
      %p177 = scmp.lt.s32.totalorder %s176, 1
      %s178 = scalar_select %p177, %s176, 1
      %s179 = smul.addr %s178, 4
      %s180 = scalar_lea.vmem %s1, %s179
      %s181 = smul.u32 2, %s17
      %s182 = smul.u32 16, %s18
      %s183 = smul.u32 2, %s17
      %p184 = scmp.lt.s32.totalorder %s182, 31
      %s185 = scalar_select %p184, %s182, 31
      %p186 = scmp.lt.s32.totalorder %s183, 1
      %s187 = scalar_select %p186, %s183, 1
      %s188 = smul.addr %s185, 2
      %s189 = sadd.s32 %s187, %s188
      %s190 = smul.addr %s189, 4
      %s191 = scalar_lea.vmem %s2, %s190
      %s192 = smul.u32 16, %s18
      %s193 = smul.u32 2, %s17
      %v195 = vld [vmem:[%s174] sm:$0xf]
      %v196 = vld [vmem:[%s174 + $0x4] sm:$0xf]
      %v197 = vld [vmem:[%s174 + $0x8] sm:$0xf]
      %v198 = vld [vmem:[%s174 + $0xc] sm:$0xf]
      %v199 = vld [vmem:[%s174 + $0x10] sm:$0xf]
      %v200 = vld [vmem:[%s174 + $0x14] sm:$0xf]
      %v201 = vld [vmem:[%s174 + $0x18] sm:$0xf]
      %v202 = vld [vmem:[%s174 + $0x1c] sm:$0xf]
      %v203 = vld [vmem:[%s174 + $0x20] sm:$0xf]
      %v204 = vld [vmem:[%s174 + $0x24] sm:$0xf]
      %v205 = vld [vmem:[%s174 + $0x28] sm:$0xf]
      %v206 = vld [vmem:[%s174 + $0x2c] sm:$0xf]
      %v207 = vld [vmem:[%s174 + $0x30] sm:$0xf]
      %v208 = vld [vmem:[%s174 + $0x34] sm:$0xf]
      %v209 = vld [vmem:[%s174 + $0x38] sm:$0xf]
      %v210 = vld [vmem:[%s174 + $0x3c] sm:$0xf]
      %v211 = vld [vmem:[%s180] sm:$0xff]
      %v212 = vld [vmem:[%s180 + $0x8] sm:$0xff]
      %v213 = vld [vmem:[%s180 + $0x10] sm:$0xff]
      %v214 = vld [vmem:[%s180 + $0x18] sm:$0xff]
      %v215 = vld [vmem:[%s180 + $0x20] sm:$0xff]
      %v216 = vld [vmem:[%s180 + $0x28] sm:$0xff]
      %v217 = vld [vmem:[%s180 + $0x30] sm:$0xff]
      %v218 = vld [vmem:[%s180 + $0x38] sm:$0xff]
      %v219 = vld [vmem:[%s180 + $0x40] sm:$0xff]
      %v220 = vld [vmem:[%s180 + $0x48] sm:$0xff]
      %v221 = vld [vmem:[%s180 + $0x50] sm:$0xff]
      %v222 = vld [vmem:[%s180 + $0x58] sm:$0xff]
      %v223 = vld [vmem:[%s180 + $0x60] sm:$0xff]
      %v224 = vld [vmem:[%s180 + $0x68] sm:$0xff]
      %v225 = vld [vmem:[%s180 + $0x70] sm:$0xff]
      %v226 = vld [vmem:[%s180 + $0x78] sm:$0xff]
      %v243 = vunpack.c.l.b16 %v195
      %v244 = vunpack.c.l.b16 %v196
      %v245 = vunpack.c.l.b16 %v197
      %v246 = vunpack.c.l.b16 %v198
      %v247 = vunpack.c.l.b16 %v199
      %v248 = vunpack.c.l.b16 %v200
      %v249 = vunpack.c.l.b16 %v201
      %v250 = vunpack.c.l.b16 %v202
      %v251 = vunpack.c.l.b16 %v203
      %v252 = vunpack.c.l.b16 %v204
      %v253 = vunpack.c.l.b16 %v205
      %v254 = vunpack.c.l.b16 %v206
      %v255 = vunpack.c.l.b16 %v207
      %v256 = vunpack.c.l.b16 %v208
      %v257 = vunpack.c.l.b16 %v209
      %v258 = vunpack.c.l.b16 %v210
      %v259 = vpack.c.b16 %v244, %v243
      %v260 = vpack.c.b16 %v246, %v245
      %v261 = vpack.c.b16 %v248, %v247
      %v262 = vpack.c.b16 %v250, %v249
      %v263 = vpack.c.b16 %v252, %v251
      %v264 = vpack.c.b16 %v254, %v253
      %v265 = vpack.c.b16 %v256, %v255
      %v266 = vpack.c.b16 %v258, %v257
      %v291 = vunpack.c.l.b16 %v211
      %v292 = vunpack.c.h.b16 %v211
      %v293 = vunpack.c.l.b16 %v212
      %v294 = vunpack.c.h.b16 %v212
      %v295 = vunpack.c.l.b16 %v213
      %v296 = vunpack.c.h.b16 %v213
      %v297 = vunpack.c.l.b16 %v214
      %v298 = vunpack.c.h.b16 %v214
      %v299 = vunpack.c.l.b16 %v215
      %v300 = vunpack.c.h.b16 %v215
      %v301 = vunpack.c.l.b16 %v216
      %v302 = vunpack.c.h.b16 %v216
      %v303 = vunpack.c.l.b16 %v217
      %v304 = vunpack.c.h.b16 %v217
      %v305 = vunpack.c.l.b16 %v218
      %v306 = vunpack.c.h.b16 %v218
      %v307 = vunpack.c.l.b16 %v219
      %v308 = vunpack.c.h.b16 %v219
      %v309 = vunpack.c.l.b16 %v220
      %v310 = vunpack.c.h.b16 %v220
      %v311 = vunpack.c.l.b16 %v221
      %v312 = vunpack.c.h.b16 %v221
      %v313 = vunpack.c.l.b16 %v222
      %v314 = vunpack.c.h.b16 %v222
      %v315 = vunpack.c.l.b16 %v223
      %v316 = vunpack.c.h.b16 %v223
      %v317 = vunpack.c.l.b16 %v224
      %v318 = vunpack.c.h.b16 %v224
      %v319 = vunpack.c.l.b16 %v225
      %v320 = vunpack.c.h.b16 %v225
      %v321 = vunpack.c.l.b16 %v226
      %v322 = vunpack.c.h.b16 %v226
      %v323 = vpack.c.b16 %v293, %v291
      %v324 = vpack.c.b16 %v294, %v292
      %v325 = vpack.c.b16 %v297, %v295
      %v326 = vpack.c.b16 %v298, %v296
      %v327 = vpack.c.b16 %v301, %v299
      %v328 = vpack.c.b16 %v302, %v300
      %v329 = vpack.c.b16 %v305, %v303
      %v330 = vpack.c.b16 %v306, %v304
      %v331 = vpack.c.b16 %v309, %v307
      %v332 = vpack.c.b16 %v310, %v308
      %v333 = vpack.c.b16 %v313, %v311
      %v334 = vpack.c.b16 %v314, %v312
      %v335 = vpack.c.b16 %v317, %v315
      %v336 = vpack.c.b16 %v318, %v316
      %v337 = vpack.c.b16 %v321, %v319
      %v338 = vpack.c.b16 %v322, %v320
      %355 = vmatprep.subr.bf16.mxu0 %v324
      %356 = vmatpush1.bf16.msra.mxu0 %v323
      %357 = vmatprep.subr.bf16.mxu0 %v326
      %358 = vmatpush1.bf16.msra.mxu0 %v325
      %359 = vmatprep.subr.bf16.mxu0 %v328
      %360 = vmatpush1.bf16.msra.mxu0 %v327
      %361 = vmatprep.subr.bf16.mxu0 %v330
      %362 = vmatpush1.bf16.msra.mxu0 %v329
      %363 = vmatprep.subr.bf16.mxu0 %v332
      %364 = vmatpush1.bf16.msra.mxu0 %v331
      %365 = vmatprep.subr.bf16.mxu0 %v334
      %366 = vmatpush1.bf16.msra.mxu0 %v333
      %367 = vmatprep.subr.bf16.mxu0 %v336
      %368 = vmatpush1.bf16.msra.mxu0 %v335
      %369 = vmatprep.subr.bf16.mxu0 %v338
      %370 = vmatpush1.bf16.msra.mxu0 %v337
      %371 = vmatprep.subr.bf16.mxu0 0
      %372 = vmatpush1.bf16.msra.mxu0 0
      %373 = vmatprep.subr.bf16.mxu0 0
      %374 = vmatpush1.bf16.msra.mxu0 0
      %375 = vmatprep.subr.bf16.mxu0 0
      %376 = vmatpush1.bf16.msra.mxu0 0
      %377 = vmatprep.subr.bf16.mxu0 0
      %378 = vmatpush1.bf16.msra.mxu0 0
      %379 = vmatprep.subr.bf16.mxu0 0
      %380 = vmatpush1.bf16.msra.mxu0 0
      %381 = vmatprep.subr.bf16.mxu0 0
      %382 = vmatpush1.bf16.msra.mxu0 0
      %383 = vmatprep.subr.bf16.mxu0 0
      %384 = vmatpush1.bf16.msra.mxu0 0
      %385 = vmatprep.subr.bf16.mxu0 0
      %386 = vmatpush1.bf16.msra.mxu0 0
      %387 = vmatprep.mubr.bf16.mxu0 0
      %388 = vmatmul.mubr.bf16.gmra.mrb[0].mxu0 %v259
      %v389 = vpop.f32.mrb[0].mxu0
      %v390 = vadd.f32 0.0, %v389
      %v391 = vpop.f32.mrb[0].mxu0
      %v392 = vadd.f32 0.0, %v391
      %v393 = vpop.f32.mrb[0].mxu0
      %v394 = vadd.f32 0.0, %v393
      %v395 = vpop.f32.mrb[0].mxu0
      %v396 = vadd.f32 0.0, %v395
      %397 = vmatprep.mubr.bf16.mxu0 0
      %398 = vmatmul.mubr.bf16.gmra.mrb[0].mxu0 %v260
      %v399 = vpop.f32.mrb[0].mxu0
      %v400 = vadd.f32 0.0, %v399
      %v401 = vpop.f32.mrb[0].mxu0
      %v402 = vadd.f32 0.0, %v401
      %v403 = vpop.f32.mrb[0].mxu0
      %v404 = vadd.f32 0.0, %v403
      %v405 = vpop.f32.mrb[0].mxu0
      %v406 = vadd.f32 0.0, %v405
      %407 = vmatprep.mubr.bf16.mxu0 0
      %408 = vmatmul.mubr.bf16.gmra.mrb[0].mxu0 %v261
      %v409 = vpop.f32.mrb[0].mxu0
      %v410 = vadd.f32 0.0, %v409
      %v411 = vpop.f32.mrb[0].mxu0
      %v412 = vadd.f32 0.0, %v411
      %v413 = vpop.f32.mrb[0].mxu0
      %v414 = vadd.f32 0.0, %v413
      %v415 = vpop.f32.mrb[0].mxu0
      %v416 = vadd.f32 0.0, %v415
      %417 = vmatprep.mubr.bf16.mxu0 0
      %418 = vmatmul.mubr.bf16.gmra.mrb[0].mxu0 %v262
      %v419 = vpop.f32.mrb[0].mxu0
      %v420 = vadd.f32 0.0, %v419
      %v421 = vpop.f32.mrb[0].mxu0
      %v422 = vadd.f32 0.0, %v421
      %v423 = vpop.f32.mrb[0].mxu0
      %v424 = vadd.f32 0.0, %v423
      %v425 = vpop.f32.mrb[0].mxu0
      %v426 = vadd.f32 0.0, %v425
      %427 = vmatprep.mubr.bf16.mxu0 0
      %428 = vmatmul.mubr.bf16.gmra.mrb[0].mxu0 %v263
      %v429 = vpop.f32.mrb[0].mxu0
      %v430 = vadd.f32 0.0, %v429
      %v431 = vpop.f32.mrb[0].mxu0
      %v432 = vadd.f32 0.0, %v431
      %v433 = vpop.f32.mrb[0].mxu0
      %v434 = vadd.f32 0.0, %v433
      %v435 = vpop.f32.mrb[0].mxu0
      %v436 = vadd.f32 0.0, %v435
      %437 = vmatprep.mubr.bf16.mxu0 0
      %438 = vmatmul.mubr.bf16.gmra.mrb[0].mxu0 %v264
      %v439 = vpop.f32.mrb[0].mxu0
      %v440 = vadd.f32 0.0, %v439
      %v441 = vpop.f32.mrb[0].mxu0
      %v442 = vadd.f32 0.0, %v441
      %v443 = vpop.f32.mrb[0].mxu0
      %v444 = vadd.f32 0.0, %v443
      %v445 = vpop.f32.mrb[0].mxu0
      %v446 = vadd.f32 0.0, %v445
      %447 = vmatprep.mubr.bf16.mxu0 0
      %448 = vmatmul.mubr.bf16.gmra.mrb[0].mxu0 %v265
      %v449 = vpop.f32.mrb[0].mxu0
      %v450 = vadd.f32 0.0, %v449
      %v451 = vpop.f32.mrb[0].mxu0
      %v452 = vadd.f32 0.0, %v451
      %v453 = vpop.f32.mrb[0].mxu0
      %v454 = vadd.f32 0.0, %v453
      %v455 = vpop.f32.mrb[0].mxu0
      %v456 = vadd.f32 0.0, %v455
      %457 = vmatprep.mubr.bf16.mxu0 0
      %458 = vmatmul.mubr.bf16.gmra.mrb[0].mxu0 %v266
      %v459 = vpop.f32.mrb[0].mxu0
      %v460 = vadd.f32 0.0, %v459
      %v461 = vpop.f32.mrb[0].mxu0
      %v462 = vadd.f32 0.0, %v461
      %v463 = vpop.f32.mrb[0].mxu0
      %v464 = vadd.f32 0.0, %v463
      %v465 = vpop.f32.mrb[0].mxu0
      %v466 = vadd.f32 0.0, %v465
      %467 = vdwg.mxu0
      %v468 = vpack.c.bf16 %v394, %v390
      %v469 = vpack.c.bf16 %v396, %v392
      %v470 = vpack.c.bf16 %v404, %v400
      %v471 = vpack.c.bf16 %v406, %v402
      %v472 = vpack.c.bf16 %v414, %v410
      %v473 = vpack.c.bf16 %v416, %v412
      %v474 = vpack.c.bf16 %v424, %v420
      %v475 = vpack.c.bf16 %v426, %v422
      %v476 = vpack.c.bf16 %v434, %v430
      %v477 = vpack.c.bf16 %v436, %v432
      %v478 = vpack.c.bf16 %v444, %v440
      %v479 = vpack.c.bf16 %v446, %v442
      %v480 = vpack.c.bf16 %v454, %v450
      %v481 = vpack.c.bf16 %v456, %v452
      %v482 = vpack.c.bf16 %v464, %v460
      %v483 = vpack.c.bf16 %v466, %v462
      %v500 = vunpack.c.l.b16 %v468
      %v501 = vunpack.c.l.b16 %v469
      %v502 = vunpack.c.h.b16 %v468
      %v503 = vunpack.c.h.b16 %v469
      %v504 = vunpack.c.l.b16 %v470
      %v505 = vunpack.c.l.b16 %v471
      %v506 = vunpack.c.h.b16 %v470
      %v507 = vunpack.c.h.b16 %v471
      %v508 = vunpack.c.l.b16 %v472
      %v509 = vunpack.c.l.b16 %v473
      %v510 = vunpack.c.h.b16 %v472
      %v511 = vunpack.c.h.b16 %v473
      %v512 = vunpack.c.l.b16 %v474
      %v513 = vunpack.c.l.b16 %v475
      %v514 = vunpack.c.h.b16 %v474
      %v515 = vunpack.c.h.b16 %v475
      %v516 = vunpack.c.l.b16 %v476
      %v517 = vunpack.c.l.b16 %v477
      %v518 = vunpack.c.h.b16 %v476
      %v519 = vunpack.c.h.b16 %v477
      %v520 = vunpack.c.l.b16 %v478
      %v521 = vunpack.c.l.b16 %v479
      %v522 = vunpack.c.h.b16 %v478
      %v523 = vunpack.c.h.b16 %v479
      %v524 = vunpack.c.l.b16 %v480
      %v525 = vunpack.c.l.b16 %v481
      %v526 = vunpack.c.h.b16 %v480
      %v527 = vunpack.c.h.b16 %v481
      %v528 = vunpack.c.l.b16 %v482
      %v529 = vunpack.c.l.b16 %v483
      %v530 = vunpack.c.h.b16 %v482
      %v531 = vunpack.c.h.b16 %v483
      %v532 = vpack.c.b16 %v501, %v500
      %v533 = vpack.c.b16 %v503, %v502
      %v534 = vpack.c.b16 %v505, %v504
      %v535 = vpack.c.b16 %v507, %v506
      %v536 = vpack.c.b16 %v509, %v508
      %v537 = vpack.c.b16 %v511, %v510
      %v538 = vpack.c.b16 %v513, %v512
      %v539 = vpack.c.b16 %v515, %v514
      %v540 = vpack.c.b16 %v517, %v516
      %v541 = vpack.c.b16 %v519, %v518
      %v542 = vpack.c.b16 %v521, %v520
      %v543 = vpack.c.b16 %v523, %v522
      %v544 = vpack.c.b16 %v525, %v524
      %v545 = vpack.c.b16 %v527, %v526
      %v546 = vpack.c.b16 %v529, %v528
      %v547 = vpack.c.b16 %v531, %v530
      %564 = vst [vmem:[%s191] sm:$0xff] %v532
      %565 = vst [vmem:[%s191 + $0x8] sm:$0xff] %v533
      %566 = vst [vmem:[%s191 + $0x10] sm:$0xff] %v534
      %567 = vst [vmem:[%s191 + $0x18] sm:$0xff] %v535
      %568 = vst [vmem:[%s191 + $0x20] sm:$0xff] %v536
      %569 = vst [vmem:[%s191 + $0x28] sm:$0xff] %v537
      %570 = vst [vmem:[%s191 + $0x30] sm:$0xff] %v538
      %571 = vst [vmem:[%s191 + $0x38] sm:$0xff] %v539
      %572 = vst [vmem:[%s191 + $0x40] sm:$0xff] %v540
      %573 = vst [vmem:[%s191 + $0x48] sm:$0xff] %v541
      %574 = vst [vmem:[%s191 + $0x50] sm:$0xff] %v542
      %575 = vst [vmem:[%s191 + $0x58] sm:$0xff] %v543
      %576 = vst [vmem:[%s191 + $0x60] sm:$0xff] %v544
      %577 = vst [vmem:[%s191 + $0x68] sm:$0xff] %v545
      %578 = vst [vmem:[%s191 + $0x70] sm:$0xff] %v546
      %579 = vst [vmem:[%s191 + $0x78] sm:$0xff] %v547
      %s580 = smul.u32 16, %s18
      %s581 = smul.u32 2, %s17
      %p582 = scmp.lt.s32.totalorder %s580, 31
      %s583 = scalar_select %p582, %s580, 31
      %p584 = scmp.lt.s32.totalorder %s581, 1
      %s585 = scalar_select %p584, %s581, 1
      %s586 = smul.addr %s583, 2
      %s587 = sadd.s32 %s585, %s586
      %s588 = smul.addr %s587, 4
      %s589 = scalar_lea.vmem %s2, %s588
      // Predicated region
      $region29: #{gcn_model_ae_forward.9} parent=27 // pred_check
        %p590 = pneg %p97
      $region30: #{gcn_model_ae_forward.9} parent=27 // pred_check_branch
        %592 = sbr.rel (%p590) target = $region32
      $region31: #{gcn_model_ae_forward.9} parent=27 // pred_region
        %s593 = smul.u32 16, %s18
        %s594 = smul.u32 2, %s17
      $region32: #{gcn_model_ae_forward.9} parent=27 // pred_fallthru
        _
    $region28: #{gcn_model_ae_forward.9} parent=5 // pred_fallthru
      _
    %p595 = scmp.le.s32.totalorder 2, %s8
    // Predicated region
    $region33: #{gcn_model_ae_forward.9} parent=5 // pred_check
      %p596 = pneg %p595
    $region34: #{gcn_model_ae_forward.9} parent=5 // pred_check_branch
      %598 = sbr.rel (%p596) target = $region36
    $region35: #{gcn_model_ae_forward.9} parent=5 // pred_region
      %s599 = ssub.s32 %s8, 2
      // Predicated region
      $region37: #{gcn_model_ae_forward.9} parent=35 // pred_check
        %p600 = pneg %p103
      $region38: #{gcn_model_ae_forward.9} parent=35 // pred_check_branch
        %602 = sbr.rel (%p600) target = $region40
      $region39: #{gcn_model_ae_forward.9} parent=35 // pred_region
        %s603 = smul.u32 16, %s20
        %s604 = smul.u32 2, %s19
        %p605 = scmp.lt.s32.totalorder %s603, 31
        %s606 = scalar_select %p605, %s603, 31
        %p607 = scmp.lt.s32.totalorder %s604, 1
        %s608 = scalar_select %p607, %s604, 1
        %s609 = smul.addr %s606, 2
        %s610 = sadd.s32 %s608, %s609
        %s611 = smul.addr %s610, 4
        %s612 = scalar_lea.vmem %s2, %s611
      $region40: #{gcn_model_ae_forward.9} parent=35 // pred_fallthru
        _
    $region36: #{gcn_model_ae_forward.9} parent=5 // pred_fallthru
      _
  $region6: #{gcn_model_ae_forward.9} parent=0 // loop_footer
    %s12 = sadd.s32 1, %s8
  $region7: #{gcn_model_ae_forward.9} parent=0 // loop_footer_branch
    %7 = sbr.rel target = $region3
  $region8: #{gcn_model_ae_forward.9} parent=0 // loop_exit
    _

</llo_original>
